<compile_context>
chip_gen: v7x
topology: tpu7x:2x2x1
jax: 0.10.0
libtpu: 0.0.40
codegen_flags: <defaults>
</compile_context>

<pallas_src>
import functools
import math

import jax
import jax.numpy as jnp
from jax import lax
from jax.experimental import pallas as pl
from jax.experimental.pallas import tpu as pltpu


NUM_ATTN_HEADS = 4          # QuantumInspiredAttention default num_heads
_ROW_BLOCK_CAP = 512        # row-tile cap: keeps per-block VMEM footprint small enough for
                            # v7x's 64 MiB VMEM when batch*seq grows; the row grid axis is
                            # marked "parallel" so Mosaic can shard tiles across v7x's 2 TCs.


def _gelu_exact(x):
    # matches torch.nn.functional.gelu (erf-based, non-approximate)
    return 0.5 * x * (1.0 + lax.erf(x * (1.0 / math.sqrt(2.0))))


def _bf16(x):
    return x.astype(jnp.bfloat16)


# ---------------------------- Pallas kernel bodies ----------------------------

def _mera_level_math(x, w1, b1, w2, b2, c_dis, u_dis, iso_w, iso_b, c_iso, u_iso):
    """Fused MERA level: Linear->ReLU->Linear->Gate (disentangler) then Linear->ReLU->Gate.

    QuantumInspiredGate's rotation x*cos(th) + x*sin(th)*cos(phi) is parameter-only, so it is
    pre-collapsed (outside the kernel) to one per-feature scale c = cos(th)+sin(th)*cos(phi).
    All matmuls take bf16 operands with f32 accumulation.
    """
    h = jnp.dot(_bf16(x), w1, preferred_element_type=jnp.float32) + b1
    h = jnp.maximum(h, 0.0)
    h = jnp.dot(_bf16(h), w2, preferred_element_type=jnp.float32) + b2
    g = _gelu_exact(jnp.dot(_bf16(h * c_dis), u_dis, preferred_element_type=jnp.float32))
    i1 = jnp.dot(_bf16(g), iso_w, preferred_element_type=jnp.float32) + iso_b
    i1 = jnp.maximum(i1, 0.0)
    return _gelu_exact(jnp.dot(_bf16(i1 * c_iso), u_iso, preferred_element_type=jnp.float32))


def _mera_level_kernel(x_ref, w1_ref, b1_ref, w2_ref, b2_ref, cdis_ref, udis_ref,
                       isow_ref, isob_ref, ciso_ref, uiso_ref, o_ref):
    o_ref[...] = _mera_level_math(
        x_ref[...], w1_ref[...], b1_ref[...], w2_ref[...], b2_ref[...], cdis_ref[...],
        udis_ref[...], isow_ref[...], isob_ref[...], ciso_ref[...], uiso_ref[...])


def _mera_level_qkv_kernel(x_ref, w1_ref, b1_ref, w2_ref, b2_ref, cdis_ref, udis_ref,
                           isow_ref, isob_ref, ciso_ref, uiso_ref,
                           wqkv_ref, bqkv_ref, o_ref):
    m = _mera_level_math(
        x_ref[...], w1_ref[...], b1_ref[...], w2_ref[...], b2_ref[...], cdis_ref[...],
        udis_ref[...], isow_ref[...], isob_ref[...], ciso_ref[...], uiso_ref[...])
    # fused Q/K/V projection: one (rows, dim) x (dim, 3*dim) matmul
    o_ref[...] = jnp.dot(_bf16(m), wqkv_ref[...],
                         preferred_element_type=jnp.float32) + bqkv_ref[...]


def _attn_out_kernel(qf_ref, kf_ref, vf_ref, sel_ref, woblk_ref, bo_ref, wf_ref, bfin_ref,
                     o_ref, *, num_heads):
    """Fused flat attention core + out_proj + final vocab projection (lane-dense output)."""
    q = _bf16(qf_ref[...])
    k = _bf16(kf_ref[...])
    v = _bf16(vf_ref[...])
    # scores = q @ k^T without an explicit transpose (contract the last dims directly);
    # the 1/sqrt(head_dim) scale is pre-folded into the Q projection weights/bias.
    s = lax.dot_general(q, k, (((1,), (1,)), ((), ())),
                        preferred_element_type=jnp.float32)
    m = jnp.max(s, axis=-1, keepdims=True)
    e = jnp.exp(s - m)
    p = e * pl.reciprocal(jnp.sum(e, axis=-1, keepdims=True), approx=True)
    attended = jnp.dot(_bf16(p), v, preferred_element_type=jnp.float32)   # (rows*H, head_dim)

    # Fold heads back: out[i, head_dim*h + d] = attended[num_heads*i + h, d].
    # Done with tiny exact 0/1 selector matmuls (sel[h]) so no in-kernel reshape is needed, then
    # immediately consumed by out_proj (per-head row blocks of W_out) -- everything stays in VMEM.
    out = bo_ref[...]                                   # (1, dim) bias, added exactly once
    for h in range(num_heads):                          # static, unrolled (num_heads small)
        rows_h = jnp.dot(sel_ref[h], attended, preferred_element_type=jnp.float32)
        out = out + jnp.dot(rows_h, woblk_ref[h], preferred_element_type=jnp.float32)

    # final vocab projection -> 128-lane-dense output slab (only HBM store of this kernel)
    o_ref[...] = jnp.dot(_bf16(out), wf_ref[...],
                         preferred_element_type=jnp.float32) + bfin_ref[...]


# ---------------------------- pallas_call wrappers ----------------------------

def _row_block(m):
    return m if m <= _ROW_BLOCK_CAP else _ROW_BLOCK_CAP


def mera_level(x2d, params, *, level, with_qkv):
    """One pallas_call for a full MERA level (optionally with the fused QKV projection)."""
    M, K = x2d.shape
    ops = [params[f"dis{level}_w1"], params[f"dis{level}_b1"],
           params[f"dis{level}_w2"], params[f"dis{level}_b2"],
           params[f"dis{level}_c"], params[f"dis{level}_U"],
           params[f"iso{level}_w"], params[f"iso{level}_b"],
           params[f"iso{level}_c"], params[f"iso{level}_U"]]
    if with_qkv:
        ops += [params["attn_qkv_w"], params["attn_qkv_b"]]
        N = params["attn_qkv_w"].shape[1]
        kernel = _mera_level_qkv_kernel
    else:
        N = params[f"iso{level}_U"].shape[1]
        kernel = _mera_level_kernel

    bm = _row_block(M)
    in_specs = [pl.BlockSpec((bm, K), lambda i: (i, 0))]
    # weights: constant block index -> stay resident in VMEM across row tiles
    in_specs += [pl.BlockSpec(w.shape, lambda i: (0, 0)) for w in ops]
    return pl.pallas_call(
        kernel,
        out_shape=jax.ShapeDtypeStruct((M, N), jnp.float32),
        grid=(pl.cdiv(M, bm),),
        in_specs=in_specs,
        out_specs=pl.BlockSpec((bm, N), lambda i: (i, 0)),
        compiler_params=pltpu.CompilerParams(dimension_semantics=("parallel",)),
    )(x2d, *ops)


def attention_block(qf, kf, vf, sel, params):
    """Fused attention + out_proj + output projection; whole problem is one VMEM block."""
    N, hd = qf.shape
    num_heads, rows, _ = sel.shape
    vocab = params["out_w"].shape[1]
    in_specs = [
        pl.BlockSpec((N, hd), lambda i: (0, 0)),
        pl.BlockSpec((N, hd), lambda i: (0, 0)),
        pl.BlockSpec((N, hd), lambda i: (0, 0)),
        pl.BlockSpec(sel.shape, lambda i: (0, 0, 0)),
        pl.BlockSpec(params["attn_out_wblk"].shape, lambda i: (0, 0, 0)),
        pl.BlockSpec(params["attn_out_b"].shape, lambda i: (0, 0)),
        pl.BlockSpec(params["out_w"].shape, lambda i: (0, 0)),
        pl.BlockSpec(params["out_b"].shape, lambda i: (0, 0)),
    ]
    return pl.pallas_call(
        functools.partial(_attn_out_kernel, num_heads=num_heads),
        out_shape=jax.ShapeDtypeStruct((rows, vocab), jnp.float32),
        grid=(1,),
        in_specs=in_specs,
        out_specs=pl.BlockSpec((rows, vocab), lambda i: (0, 0)),
        compiler_params=pltpu.CompilerParams(dimension_semantics=("arbitrary",)),
    )(qf, kf, vf, sel, params["attn_out_wblk"], params["attn_out_b"],
      params["out_w"], params["out_b"])


# ---------------------------- parameter setup ----------------------------

def _orthogonal(key, n):
    a = jax.random.normal(key, (n, n), dtype=jnp.float32)
    q, r = jnp.linalg.qr(a)
    return q * jnp.sign(jnp.diagonal(r))[None, :]


def init_params(key, vocab_size, hidden_dim, num_heads=NUM_ATTN_HEADS):
    ks = iter(jax.random.split(key, 64))
    p = {}
    p["tok_emb"] = jax.random.normal(next(ks), (vocab_size, hidden_dim)) * 0.02
    p["pos_emb"] = jax.random.normal(next(ks), (1024, hidden_dim)) * 0.02

    hd = [hidden_dim // 2, hidden_dim // 4]  # MERA hidden_dims
    for level in range(2):
        d = 2 * hd[level]
        out_d = hd[level + 1] if level < 1 else hd[-1]
        p[f"dis{level}_w1"] = (jax.random.normal(next(ks), (d, d)) * 0.02).astype(jnp.bfloat16)
        p[f"dis{level}_b1"] = jax.random.normal(next(ks), (1, d)) * 0.02
        p[f"dis{level}_w2"] = (jax.random.normal(next(ks), (d, d)) * 0.02).astype(jnp.bfloat16)
        p[f"dis{level}_b2"] = jax.random.normal(next(ks), (1, d)) * 0.02
        theta = jax.random.normal(next(ks), (d,)) * 0.02
        phi = jax.random.normal(next(ks), (d,)) * 0.02
        # parameter-only rotation collapsed to one per-feature scale (no in-kernel cos/sin)
        p[f"dis{level}_c"] = (jnp.cos(theta) + jnp.sin(theta) * jnp.cos(phi)).reshape(1, d)
        p[f"dis{level}_U"] = _orthogonal(next(ks), d).astype(jnp.bfloat16)
        p[f"iso{level}_w"] = (jax.random.normal(next(ks), (d, out_d)) * 0.02).astype(jnp.bfloat16)
        p[f"iso{level}_b"] = jax.random.normal(next(ks), (1, out_d)) * 0.02
        theta_i = jax.random.normal(next(ks), (out_d,)) * 0.02
        phi_i = jax.random.normal(next(ks), (out_d,)) * 0.02
        p[f"iso{level}_c"] = (jnp.cos(theta_i) + jnp.sin(theta_i) * jnp.cos(phi_i)).reshape(1, out_d)
        p[f"iso{level}_U"] = _orthogonal(next(ks), out_d).astype(jnp.bfloat16)

    attn_dim = hd[-1]
    head_dim = attn_dim // num_heads
    scale = 1.0 / math.sqrt(head_dim)
    # TODO(synk): TensorTrain(shape, rank=[4]).to_tensor() is not defined in the reference
    # source; we materialize dense [in, out] weights of the same shape.
    wq = jax.random.normal(next(ks), (attn_dim, attn_dim)) * 0.02
    wk = jax.random.normal(next(ks), (attn_dim, attn_dim)) * 0.02
    wv = jax.random.normal(next(ks), (attn_dim, attn_dim)) * 0.02
    bq = jax.random.normal(next(ks), (attn_dim,)) * 0.02
    bk = jax.random.normal(next(ks), (attn_dim,)) * 0.02
    bv = jax.random.normal(next(ks), (attn_dim,)) * 0.02
    # fused QKV with the 1/sqrt(head_dim) score scale folded into the Q slice
    p["attn_qkv_w"] = jnp.concatenate([wq * scale, wk, wv], axis=1).astype(jnp.bfloat16)
    p["attn_qkv_b"] = jnp.concatenate([bq * scale, bk, bv]).reshape(1, 3 * attn_dim)
    wo = jax.random.normal(next(ks), (attn_dim, attn_dim)) * 0.02
    # out_proj weight pre-split into per-head row blocks so the kernel can undo the
    # (rows*heads, head_dim) flattening with selector matmuls instead of a reshape.
    p["attn_out_wblk"] = wo.reshape(num_heads, head_dim, attn_dim)
    p["attn_out_b"] = (jax.random.normal(next(ks), (attn_dim,)) * 0.02).reshape(1, attn_dim)

    # TODO(synk): source declares output_projection = Linear(hidden_dim, vocab) but the MERA
    # output feature dim is hidden_dim // 4 (source shape bug); use the dim actually produced.
    p["out_w"] = (jax.random.normal(next(ks), (attn_dim, vocab_size)) * 0.02).astype(jnp.bfloat16)
    p["out_b"] = (jax.random.normal(next(ks), (vocab_size,)) * 0.02).reshape(1, vocab_size)
    return p


# ---------------------------- forward pass ----------------------------

def forward(params, input_ids, num_layers):
    B, S = input_ids.shape
    H = params["tok_emb"].shape[1]

    # Embedding lookup + positional embedding (gather glue stays in JAX/XLA).
    x = jnp.take(params["tok_emb"], input_ids, axis=0)           # (B, S, H)
    x = x + params["pos_emb"][:S][None, :, :]

    # TODO(synk): QuantumEnhancedLayer is not defined in the reference source; the num_layers
    # quantum layers are treated as identity passthroughs.
    for _ in range(num_layers):
        pass

    # ------------------------------- MERA -------------------------------
    hd = [H // 2, H // 4]
    # level 0: one fused pallas_call (disentangler + gate + isometry + gate)
    flat0 = x.reshape(B, -1, 2 * hd[0]).reshape(-1, 2 * hd[0])
    y0 = mera_level(flat0, params, level=0, with_qkv=False)      # (B*r0, hd[1])

    # level 1 (+ fused QKV projection); inter-level .view() is a free row-major reshape in JAX
    flat1 = y0.reshape(B, -1).reshape(B, -1, 2 * hd[1]).reshape(-1, 2 * hd[1])
    qkv = mera_level(flat1, params, level=1, with_qkv=True)      # (B*r1, 3*attn_dim)

    # ---------- QuantumInspiredAttention (flattened across batch & heads, as in the reference) ----------
    attn_dim = hd[-1]
    head_dim = attn_dim // NUM_ATTN_HEADS
    rows = qkv.shape[0]
    # TODO(synk): SimulatedQuantumEmbedding.embed/measure are not defined in the reference
    # source; treated as identity maps on the (-1, head_dim) views.
    qf = qkv[:, :attn_dim].reshape(-1, head_dim)
    kf = qkv[:, attn_dim:2 * attn_dim].reshape(-1, head_dim)
    vf = qkv[:, 2 * attn_dim:].reshape(-1, head_dim)
    # selector matrices sel[h, i, NUM_ATTN_HEADS*i + h] = 1 (constant-folded at compile time)
    sel = jax.nn.one_hot(
        jnp.arange(rows)[None, :] * NUM_ATTN_HEADS + jnp.arange(NUM_ATTN_HEADS)[:, None],
        rows * NUM_ATTN_HEADS, dtype=jnp.float32)                # (heads, rows, rows*heads)

    logits = attention_block(qf, kf, vf, sel, params)            # (B*r1, vocab), 128-lane dense
    return logits.reshape(B, -1, logits.shape[-1])


if __name__ == "__main__":
    vocab_size = 128
    hidden_dim = 64
    num_layers = 2
    num_heads = 4
    quantum_dim = 16  # unused: consumed only by the undefined QuantumEnhancedLayer
    B, S = 2, 8

    key = jax.random.PRNGKey(0)
    pkey, dkey = jax.random.split(key)
    params = init_params(pkey, vocab_size, hidden_dim)
    input_ids = jax.random.randint(dkey, (B, S), 0, vocab_size, dtype=jnp.int32)

    fwd = jax.jit(functools.partial(forward, num_layers=num_layers))
    logits = fwd(params, input_ids)
    jax.block_until_ready(logits)

    # MERA halves the sequence once (level 1) and reduces features to hidden_dim//4,
    # so logits are (B, S//2, vocab_size).
    assert logits.shape == (B, S // 2, vocab_size), logits.shape
    assert bool(jnp.all(jnp.isfinite(logits)))
    print("KERNEL_OK")
</pallas_src>

<mosaic_0001>
module attributes {stable_mosaic.version = 11 : i64} {
  func.func @_mera_level_kernel(%arg0: i32, %arg1: memref<16x64xf32, #tpu.memory_space<vmem>>, %arg2: memref<64x64xbf16, #tpu.memory_space<vmem>>, %arg3: memref<1x64xf32, #tpu.memory_space<vmem>>, %arg4: memref<64x64xbf16, #tpu.memory_space<vmem>>, %arg5: memref<1x64xf32, #tpu.memory_space<vmem>>, %arg6: memref<1x64xf32, #tpu.memory_space<vmem>>, %arg7: memref<64x64xbf16, #tpu.memory_space<vmem>>, %arg8: memref<64x16xbf16, #tpu.memory_space<vmem>>, %arg9: memref<1x16xf32, #tpu.memory_space<vmem>>, %arg10: memref<1x16xf32, #tpu.memory_space<vmem>>, %arg11: memref<16x16xbf16, #tpu.memory_space<vmem>>, %arg12: memref<16x16xf32, #tpu.memory_space<vmem>>) attributes {dimension_semantics = [#tpu.dimension_semantics<parallel>], iteration_bounds = array<i64: 1>, scalar_prefetch = 0 : i64, scratch_operands = 0 : i64, tpu.core_type = #tpu.core_type<tc>, window_params = [{transform_indices = @transform_0, window_bounds = array<i64: 16, 64>}, {pipeline_mode = #tpu.pipeline_mode<synchronous>, transform_indices = @transform_1, window_bounds = array<i64: 64, 64>}, {pipeline_mode = #tpu.pipeline_mode<synchronous>, transform_indices = @transform_2, window_bounds = array<i64: 1, 64>}, {pipeline_mode = #tpu.pipeline_mode<synchronous>, transform_indices = @transform_3, window_bounds = array<i64: 64, 64>}, {pipeline_mode = #tpu.pipeline_mode<synchronous>, transform_indices = @transform_4, window_bounds = array<i64: 1, 64>}, {pipeline_mode = #tpu.pipeline_mode<synchronous>, transform_indices = @transform_5, window_bounds = array<i64: 1, 64>}, {pipeline_mode = #tpu.pipeline_mode<synchronous>, transform_indices = @transform_6, window_bounds = array<i64: 64, 64>}, {pipeline_mode = #tpu.pipeline_mode<synchronous>, transform_indices = @transform_7, window_bounds = array<i64: 64, 16>}, {pipeline_mode = #tpu.pipeline_mode<synchronous>, transform_indices = @transform_8, window_bounds = array<i64: 1, 16>}, {pipeline_mode = #tpu.pipeline_mode<synchronous>, transform_indices = @transform_9, window_bounds = array<i64: 1, 16>}, {pipeline_mode = #tpu.pipeline_mode<synchronous>, transform_indices = @transform_10, window_bounds = array<i64: 16, 16>}, {transform_indices = @transform_11, window_bounds = array<i64: 16, 16>}]} {
    %c0 = arith.constant 0 : index
    %c0_0 = arith.constant 0 : index
    %0 = vector.load %arg1[%c0, %c0_0] : memref<16x64xf32, #tpu.memory_space<vmem>>, vector<16x64xf32>
    %c0_1 = arith.constant 0 : index
    %c0_2 = arith.constant 0 : index
    %1 = vector.load %arg2[%c0_1, %c0_2] : memref<64x64xbf16, #tpu.memory_space<vmem>>, vector<64x64xbf16>
    %c0_3 = arith.constant 0 : index
    %c0_4 = arith.constant 0 : index
    %2 = vector.load %arg3[%c0_3, %c0_4] : memref<1x64xf32, #tpu.memory_space<vmem>>, vector<1x64xf32>
    %c0_5 = arith.constant 0 : index
    %c0_6 = arith.constant 0 : index
    %3 = vector.load %arg4[%c0_5, %c0_6] : memref<64x64xbf16, #tpu.memory_space<vmem>>, vector<64x64xbf16>
    %c0_7 = arith.constant 0 : index
    %c0_8 = arith.constant 0 : index
    %4 = vector.load %arg5[%c0_7, %c0_8] : memref<1x64xf32, #tpu.memory_space<vmem>>, vector<1x64xf32>
    %c0_9 = arith.constant 0 : index
    %c0_10 = arith.constant 0 : index
    %5 = vector.load %arg6[%c0_9, %c0_10] : memref<1x64xf32, #tpu.memory_space<vmem>>, vector<1x64xf32>
    %c0_11 = arith.constant 0 : index
    %c0_12 = arith.constant 0 : index
    %6 = vector.load %arg7[%c0_11, %c0_12] : memref<64x64xbf16, #tpu.memory_space<vmem>>, vector<64x64xbf16>
    %c0_13 = arith.constant 0 : index
    %c0_14 = arith.constant 0 : index
    %7 = vector.load %arg8[%c0_13, %c0_14] : memref<64x16xbf16, #tpu.memory_space<vmem>>, vector<64x16xbf16>
    %c0_15 = arith.constant 0 : index
    %c0_16 = arith.constant 0 : index
    %8 = vector.load %arg9[%c0_15, %c0_16] : memref<1x16xf32, #tpu.memory_space<vmem>>, vector<1x16xf32>
    %c0_17 = arith.constant 0 : index
    %c0_18 = arith.constant 0 : index
    %9 = vector.load %arg10[%c0_17, %c0_18] : memref<1x16xf32, #tpu.memory_space<vmem>>, vector<1x16xf32>
    %c0_19 = arith.constant 0 : index
    %c0_20 = arith.constant 0 : index
    %10 = vector.load %arg11[%c0_19, %c0_20] : memref<16x16xbf16, #tpu.memory_space<vmem>>, vector<16x16xbf16>
    %11 = arith.truncf %0 : vector<16x64xf32> to vector<16x64xbf16>
    %cst = arith.constant dense<0.000000e+00> : vector<16x64xf32>
    %12 = tpu.matmul %11, %1, %cst {dimension_numbers = #tpu.dot_dimension_numbers<[1], [0], [0], [1], [0, 0, 1, 1], [], []>} : vector<16x64xbf16>, vector<64x64xbf16>, vector<16x64xf32> -> vector<16x64xf32>
    %13 = vector.broadcast %2 : vector<1x64xf32> to vector<16x64xf32>
    %14 = arith.addf %12, %13 : vector<16x64xf32>
    %cst_21 = arith.constant 0.000000e+00 : f32
    %15 = vector.broadcast %cst_21 : f32 to vector<16x64xf32>
    %16 = arith.maximumf %14, %15 : vector<16x64xf32>
    %17 = arith.truncf %16 : vector<16x64xf32> to vector<16x64xbf16>
    %cst_22 = arith.constant dense<0.000000e+00> : vector<16x64xf32>
    %18 = tpu.matmul %17, %3, %cst_22 {dimension_numbers = #tpu.dot_dimension_numbers<[1], [0], [0], [1], [0, 0, 1, 1], [], []>} : vector<16x64xbf16>, vector<64x64xbf16>, vector<16x64xf32> -> vector<16x64xf32>
    %19 = vector.broadcast %4 : vector<1x64xf32> to vector<16x64xf32>
    %20 = arith.addf %18, %19 : vector<16x64xf32>
    %21 = vector.broadcast %5 : vector<1x64xf32> to vector<16x64xf32>
    %22 = arith.mulf %20, %21 : vector<16x64xf32>
    %23 = arith.truncf %22 : vector<16x64xf32> to vector<16x64xbf16>
    %cst_23 = arith.constant dense<0.000000e+00> : vector<16x64xf32>
    %24 = tpu.matmul %23, %6, %cst_23 {dimension_numbers = #tpu.dot_dimension_numbers<[1], [0], [0], [1], [0, 0, 1, 1], [], []>} : vector<16x64xbf16>, vector<64x64xbf16>, vector<16x64xf32> -> vector<16x64xf32>
    %cst_24 = arith.constant 5.000000e-01 : f32
    %25 = vector.broadcast %cst_24 : f32 to vector<16x64xf32>
    %26 = arith.mulf %25, %24 : vector<16x64xf32>
    %cst_25 = arith.constant 0.707106769 : f32
    %27 = vector.broadcast %cst_25 : f32 to vector<16x64xf32>
    %28 = arith.mulf %24, %27 : vector<16x64xf32>
    %29 = math.erf %28 : vector<16x64xf32>
    %cst_26 = arith.constant 1.000000e+00 : f32
    %30 = vector.broadcast %cst_26 : f32 to vector<16x64xf32>
    %31 = arith.addf %30, %29 : vector<16x64xf32>
    %32 = arith.mulf %26, %31 : vector<16x64xf32>
    %33 = arith.truncf %32 : vector<16x64xf32> to vector<16x64xbf16>
    %cst_27 = arith.constant dense<0.000000e+00> : vector<16x16xf32>
    %34 = tpu.matmul %33, %7, %cst_27 {dimension_numbers = #tpu.dot_dimension_numbers<[1], [0], [0], [1], [0, 0, 1, 1], [], []>} : vector<16x64xbf16>, vector<64x16xbf16>, vector<16x16xf32> -> vector<16x16xf32>
    %35 = vector.broadcast %8 : vector<1x16xf32> to vector<16x16xf32>
    %36 = arith.addf %34, %35 : vector<16x16xf32>
    %cst_28 = arith.constant 0.000000e+00 : f32
    %37 = vector.broadcast %cst_28 : f32 to vector<16x16xf32>
    %38 = arith.maximumf %36, %37 : vector<16x16xf32>
    %39 = vector.broadcast %9 : vector<1x16xf32> to vector<16x16xf32>
    %40 = arith.mulf %38, %39 : vector<16x16xf32>
    %41 = arith.truncf %40 : vector<16x16xf32> to vector<16x16xbf16>
    %cst_29 = arith.constant dense<0.000000e+00> : vector<16x16xf32>
    %42 = tpu.matmul %41, %10, %cst_29 {dimension_numbers = #tpu.dot_dimension_numbers<[1], [0], [0], [1], [0, 0, 1, 1], [], []>} : vector<16x16xbf16>, vector<16x16xbf16>, vector<16x16xf32> -> vector<16x16xf32>
    %cst_30 = arith.constant 5.000000e-01 : f32
    %43 = vector.broadcast %cst_30 : f32 to vector<16x16xf32>
    %44 = arith.mulf %43, %42 : vector<16x16xf32>
    %cst_31 = arith.constant 0.707106769 : f32
    %45 = vector.broadcast %cst_31 : f32 to vector<16x16xf32>
    %46 = arith.mulf %42, %45 : vector<16x16xf32>
    %47 = math.erf %46 : vector<16x16xf32>
    %cst_32 = arith.constant 1.000000e+00 : f32
    %48 = vector.broadcast %cst_32 : f32 to vector<16x16xf32>
    %49 = arith.addf %48, %47 : vector<16x16xf32>
    %50 = arith.mulf %44, %49 : vector<16x16xf32>
    %c0_33 = arith.constant 0 : index
    %c0_34 = arith.constant 0 : index
    %51 = vector.load %arg12[%c0_33, %c0_34] : memref<16x16xf32, #tpu.memory_space<vmem>>, vector<16x16xf32>
    tpu.vector_store %arg12[%c0_33, %c0_34], %50 {strides = array<i32>} : memref<16x16xf32, #tpu.memory_space<vmem>>, vector<16x16xf32>,
    return
  }
  func.func @transform_0(%arg0: i32) -> (i32, i32) {
    %c0_i32 = arith.constant 0 : i32
    %c0_i32_0 = arith.constant 0 : i32
    return %arg0, %c0_i32 : i32, i32
  }
  func.func @transform_1(%arg0: i32) -> (i32, i32) {
    %c0_i32 = arith.constant 0 : i32
    %c0_i32_0 = arith.constant 0 : i32
    %c0_i32_1 = arith.constant 0 : i32
    return %c0_i32, %c0_i32_0 : i32, i32
  }
  func.func @transform_2(%arg0: i32) -> (i32, i32) {
    %c0_i32 = arith.constant 0 : i32
    %c0_i32_0 = arith.constant 0 : i32
    %c0_i32_1 = arith.constant 0 : i32
    return %c0_i32, %c0_i32_0 : i32, i32
  }
  func.func @transform_3(%arg0: i32) -> (i32, i32) {
    %c0_i32 = arith.constant 0 : i32
    %c0_i32_0 = arith.constant 0 : i32
    %c0_i32_1 = arith.constant 0 : i32
    return %c0_i32, %c0_i32_0 : i32, i32
  }
  func.func @transform_4(%arg0: i32) -> (i32, i32) {
    %c0_i32 = arith.constant 0 : i32
    %c0_i32_0 = arith.constant 0 : i32
    %c0_i32_1 = arith.constant 0 : i32
    return %c0_i32, %c0_i32_0 : i32, i32
  }
  func.func @transform_5(%arg0: i32) -> (i32, i32) {
    %c0_i32 = arith.constant 0 : i32
    %c0_i32_0 = arith.constant 0 : i32
    %c0_i32_1 = arith.constant 0 : i32
    return %c0_i32, %c0_i32_0 : i32, i32
  }
  func.func @transform_6(%arg0: i32) -> (i32, i32) {
    %c0_i32 = arith.constant 0 : i32
    %c0_i32_0 = arith.constant 0 : i32
    %c0_i32_1 = arith.constant 0 : i32
    return %c0_i32, %c0_i32_0 : i32, i32
  }
  func.func @transform_7(%arg0: i32) -> (i32, i32) {
    %c0_i32 = arith.constant 0 : i32
    %c0_i32_0 = arith.constant 0 : i32
    %c0_i32_1 = arith.constant 0 : i32
    return %c0_i32, %c0_i32_0 : i32, i32
  }
  func.func @transform_8(%arg0: i32) -> (i32, i32) {
    %c0_i32 = arith.constant 0 : i32
    %c0_i32_0 = arith.constant 0 : i32
    %c0_i32_1 = arith.constant 0 : i32
    return %c0_i32, %c0_i32_0 : i32, i32
  }
  func.func @transform_9(%arg0: i32) -> (i32, i32) {
    %c0_i32 = arith.constant 0 : i32
    %c0_i32_0 = arith.constant 0 : i32
    %c0_i32_1 = arith.constant 0 : i32
    return %c0_i32, %c0_i32_0 : i32, i32
  }
  func.func @transform_10(%arg0: i32) -> (i32, i32) {
    %c0_i32 = arith.constant 0 : i32
    %c0_i32_0 = arith.constant 0 : i32
    %c0_i32_1 = arith.constant 0 : i32
    return %c0_i32, %c0_i32_0 : i32, i32
  }
  func.func @transform_11(%arg0: i32) -> (i32, i32) {
    %c0_i32 = arith.constant 0 : i32
    %c0_i32_0 = arith.constant 0 : i32
    return %arg0, %c0_i32 : i32, i32
  }
}

module attributes {stable_mosaic.version = 11 : i64} {
  func.func @_mera_level_qkv_kernel(%arg0: i32, %arg1: memref<8x32xf32, #tpu.memory_space<vmem>>, %arg2: memref<32x32xbf16, #tpu.memory_space<vmem>>, %arg3: memref<1x32xf32, #tpu.memory_space<vmem>>, %arg4: memref<32x32xbf16, #tpu.memory_space<vmem>>, %arg5: memref<1x32xf32, #tpu.memory_space<vmem>>, %arg6: memref<1x32xf32, #tpu.memory_space<vmem>>, %arg7: memref<32x32xbf16, #tpu.memory_space<vmem>>, %arg8: memref<32x16xbf16, #tpu.memory_space<vmem>>, %arg9: memref<1x16xf32, #tpu.memory_space<vmem>>, %arg10: memref<1x16xf32, #tpu.memory_space<vmem>>, %arg11: memref<16x16xbf16, #tpu.memory_space<vmem>>, %arg12: memref<16x48xbf16, #tpu.memory_space<vmem>>, %arg13: memref<1x48xf32, #tpu.memory_space<vmem>>, %arg14: memref<8x48xf32, #tpu.memory_space<vmem>>) attributes {dimension_semantics = [#tpu.dimension_semantics<parallel>], iteration_bounds = array<i64: 1>, scalar_prefetch = 0 : i64, scratch_operands = 0 : i64, tpu.core_type = #tpu.core_type<tc>, window_params = [{transform_indices = @transform_0, window_bounds = array<i64: 8, 32>}, {pipeline_mode = #tpu.pipeline_mode<synchronous>, transform_indices = @transform_1, window_bounds = array<i64: 32, 32>}, {pipeline_mode = #tpu.pipeline_mode<synchronous>, transform_indices = @transform_2, window_bounds = array<i64: 1, 32>}, {pipeline_mode = #tpu.pipeline_mode<synchronous>, transform_indices = @transform_3, window_bounds = array<i64: 32, 32>}, {pipeline_mode = #tpu.pipeline_mode<synchronous>, transform_indices = @transform_4, window_bounds = array<i64: 1, 32>}, {pipeline_mode = #tpu.pipeline_mode<synchronous>, transform_indices = @transform_5, window_bounds = array<i64: 1, 32>}, {pipeline_mode = #tpu.pipeline_mode<synchronous>, transform_indices = @transform_6, window_bounds = array<i64: 32, 32>}, {pipeline_mode = #tpu.pipeline_mode<synchronous>, transform_indices = @transform_7, window_bounds = array<i64: 32, 16>}, {pipeline_mode = #tpu.pipeline_mode<synchronous>, transform_indices = @transform_8, window_bounds = array<i64: 1, 16>}, {pipeline_mode = #tpu.pipeline_mode<synchronous>, transform_indices = @transform_9, window_bounds = array<i64: 1, 16>}, {pipeline_mode = #tpu.pipeline_mode<synchronous>, transform_indices = @transform_10, window_bounds = array<i64: 16, 16>}, {pipeline_mode = #tpu.pipeline_mode<synchronous>, transform_indices = @transform_11, window_bounds = array<i64: 16, 48>}, {pipeline_mode = #tpu.pipeline_mode<synchronous>, transform_indices = @transform_12, window_bounds = array<i64: 1, 48>}, {transform_indices = @transform_13, window_bounds = array<i64: 8, 48>}]} {
    %c0 = arith.constant 0 : index
    %c0_0 = arith.constant 0 : index
    %0 = vector.load %arg1[%c0, %c0_0] : memref<8x32xf32, #tpu.memory_space<vmem>>, vector<8x32xf32>
    %c0_1 = arith.constant 0 : index
    %c0_2 = arith.constant 0 : index
    %1 = vector.load %arg2[%c0_1, %c0_2] : memref<32x32xbf16, #tpu.memory_space<vmem>>, vector<32x32xbf16>
    %c0_3 = arith.constant 0 : index
    %c0_4 = arith.constant 0 : index
    %2 = vector.load %arg3[%c0_3, %c0_4] : memref<1x32xf32, #tpu.memory_space<vmem>>, vector<1x32xf32>
    %c0_5 = arith.constant 0 : index
    %c0_6 = arith.constant 0 : index
    %3 = vector.load %arg4[%c0_5, %c0_6] : memref<32x32xbf16, #tpu.memory_space<vmem>>, vector<32x32xbf16>
    %c0_7 = arith.constant 0 : index
    %c0_8 = arith.constant 0 : index
    %4 = vector.load %arg5[%c0_7, %c0_8] : memref<1x32xf32, #tpu.memory_space<vmem>>, vector<1x32xf32>
    %c0_9 = arith.constant 0 : index
    %c0_10 = arith.constant 0 : index
    %5 = vector.load %arg6[%c0_9, %c0_10] : memref<1x32xf32, #tpu.memory_space<vmem>>, vector<1x32xf32>
    %c0_11 = arith.constant 0 : index
    %c0_12 = arith.constant 0 : index
    %6 = vector.load %arg7[%c0_11, %c0_12] : memref<32x32xbf16, #tpu.memory_space<vmem>>, vector<32x32xbf16>
    %c0_13 = arith.constant 0 : index
    %c0_14 = arith.constant 0 : index
    %7 = vector.load %arg8[%c0_13, %c0_14] : memref<32x16xbf16, #tpu.memory_space<vmem>>, vector<32x16xbf16>
    %c0_15 = arith.constant 0 : index
    %c0_16 = arith.constant 0 : index
    %8 = vector.load %arg9[%c0_15, %c0_16] : memref<1x16xf32, #tpu.memory_space<vmem>>, vector<1x16xf32>
    %c0_17 = arith.constant 0 : index
    %c0_18 = arith.constant 0 : index
    %9 = vector.load %arg10[%c0_17, %c0_18] : memref<1x16xf32, #tpu.memory_space<vmem>>, vector<1x16xf32>
    %c0_19 = arith.constant 0 : index
    %c0_20 = arith.constant 0 : index
    %10 = vector.load %arg11[%c0_19, %c0_20] : memref<16x16xbf16, #tpu.memory_space<vmem>>, vector<16x16xbf16>
    %11 = arith.truncf %0 : vector<8x32xf32> to vector<8x32xbf16>
    %cst = arith.constant dense<0.000000e+00> : vector<8x32xf32>
    %12 = tpu.matmul %11, %1, %cst {dimension_numbers = #tpu.dot_dimension_numbers<[1], [0], [0], [1], [0, 0, 1, 1], [], []>} : vector<8x32xbf16>, vector<32x32xbf16>, vector<8x32xf32> -> vector<8x32xf32>
    %13 = vector.broadcast %2 : vector<1x32xf32> to vector<8x32xf32>
    %14 = arith.addf %12, %13 : vector<8x32xf32>
    %cst_21 = arith.constant 0.000000e+00 : f32
    %15 = vector.broadcast %cst_21 : f32 to vector<8x32xf32>
    %16 = arith.maximumf %14, %15 : vector<8x32xf32>
    %17 = arith.truncf %16 : vector<8x32xf32> to vector<8x32xbf16>
    %cst_22 = arith.constant dense<0.000000e+00> : vector<8x32xf32>
    %18 = tpu.matmul %17, %3, %cst_22 {dimension_numbers = #tpu.dot_dimension_numbers<[1], [0], [0], [1], [0, 0, 1, 1], [], []>} : vector<8x32xbf16>, vector<32x32xbf16>, vector<8x32xf32> -> vector<8x32xf32>
    %19 = vector.broadcast %4 : vector<1x32xf32> to vector<8x32xf32>
    %20 = arith.addf %18, %19 : vector<8x32xf32>
    %21 = vector.broadcast %5 : vector<1x32xf32> to vector<8x32xf32>
    %22 = arith.mulf %20, %21 : vector<8x32xf32>
    %23 = arith.truncf %22 : vector<8x32xf32> to vector<8x32xbf16>
    %cst_23 = arith.constant dense<0.000000e+00> : vector<8x32xf32>
    %24 = tpu.matmul %23, %6, %cst_23 {dimension_numbers = #tpu.dot_dimension_numbers<[1], [0], [0], [1], [0, 0, 1, 1], [], []>} : vector<8x32xbf16>, vector<32x32xbf16>, vector<8x32xf32> -> vector<8x32xf32>
    %cst_24 = arith.constant 5.000000e-01 : f32
    %25 = vector.broadcast %cst_24 : f32 to vector<8x32xf32>
    %26 = arith.mulf %25, %24 : vector<8x32xf32>
    %cst_25 = arith.constant 0.707106769 : f32
    %27 = vector.broadcast %cst_25 : f32 to vector<8x32xf32>
    %28 = arith.mulf %24, %27 : vector<8x32xf32>
    %29 = math.erf %28 : vector<8x32xf32>
    %cst_26 = arith.constant 1.000000e+00 : f32
    %30 = vector.broadcast %cst_26 : f32 to vector<8x32xf32>
    %31 = arith.addf %30, %29 : vector<8x32xf32>
    %32 = arith.mulf %26, %31 : vector<8x32xf32>
    %33 = arith.truncf %32 : vector<8x32xf32> to vector<8x32xbf16>
    %cst_27 = arith.constant dense<0.000000e+00> : vector<8x16xf32>
    %34 = tpu.matmul %33, %7, %cst_27 {dimension_numbers = #tpu.dot_dimension_numbers<[1], [0], [0], [1], [0, 0, 1, 1], [], []>} : vector<8x32xbf16>, vector<32x16xbf16>, vector<8x16xf32> -> vector<8x16xf32>
    %35 = vector.broadcast %8 : vector<1x16xf32> to vector<8x16xf32>
    %36 = arith.addf %34, %35 : vector<8x16xf32>
    %cst_28 = arith.constant 0.000000e+00 : f32
    %37 = vector.broadcast %cst_28 : f32 to vector<8x16xf32>
    %38 = arith.maximumf %36, %37 : vector<8x16xf32>
    %39 = vector.broadcast %9 : vector<1x16xf32> to vector<8x16xf32>
    %40 = arith.mulf %38, %39 : vector<8x16xf32>
    %41 = arith.truncf %40 : vector<8x16xf32> to vector<8x16xbf16>
    %cst_29 = arith.constant dense<0.000000e+00> : vector<8x16xf32>
    %42 = tpu.matmul %41, %10, %cst_29 {dimension_numbers = #tpu.dot_dimension_numbers<[1], [0], [0], [1], [0, 0, 1, 1], [], []>} : vector<8x16xbf16>, vector<16x16xbf16>, vector<8x16xf32> -> vector<8x16xf32>
    %cst_30 = arith.constant 5.000000e-01 : f32
    %43 = vector.broadcast %cst_30 : f32 to vector<8x16xf32>
    %44 = arith.mulf %43, %42 : vector<8x16xf32>
    %cst_31 = arith.constant 0.707106769 : f32
    %45 = vector.broadcast %cst_31 : f32 to vector<8x16xf32>
    %46 = arith.mulf %42, %45 : vector<8x16xf32>
    %47 = math.erf %46 : vector<8x16xf32>
    %cst_32 = arith.constant 1.000000e+00 : f32
    %48 = vector.broadcast %cst_32 : f32 to vector<8x16xf32>
    %49 = arith.addf %48, %47 : vector<8x16xf32>
    %50 = arith.mulf %44, %49 : vector<8x16xf32>
    %51 = arith.truncf %50 : vector<8x16xf32> to vector<8x16xbf16>
    %c0_33 = arith.constant 0 : index
    %c0_34 = arith.constant 0 : index
    %52 = vector.load %arg12[%c0_33, %c0_34] : memref<16x48xbf16, #tpu.memory_space<vmem>>, vector<16x48xbf16>
    %cst_35 = arith.constant dense<0.000000e+00> : vector<8x48xf32>
    %53 = tpu.matmul %51, %52, %cst_35 {dimension_numbers = #tpu.dot_dimension_numbers<[1], [0], [0], [1], [0, 0, 1, 1], [], []>} : vector<8x16xbf16>, vector<16x48xbf16>, vector<8x48xf32> -> vector<8x48xf32>
    %c0_36 = arith.constant 0 : index
    %c0_37 = arith.constant 0 : index
    %54 = vector.load %arg13[%c0_36, %c0_37] : memref<1x48xf32, #tpu.memory_space<vmem>>, vector<1x48xf32>
    %55 = vector.broadcast %54 : vector<1x48xf32> to vector<8x48xf32>
    %56 = arith.addf %53, %55 : vector<8x48xf32>
    %c0_38 = arith.constant 0 : index
    %c0_39 = arith.constant 0 : index
    %57 = vector.load %arg14[%c0_38, %c0_39] : memref<8x48xf32, #tpu.memory_space<vmem>>, vector<8x48xf32>
    tpu.vector_store %arg14[%c0_38, %c0_39], %56 {strides = array<i32>} : memref<8x48xf32, #tpu.memory_space<vmem>>, vector<8x48xf32>,
    return
  }
  func.func @transform_0(%arg0: i32) -> (i32, i32) {
    %c0_i32 = arith.constant 0 : i32
    %c0_i32_0 = arith.constant 0 : i32
    return %arg0, %c0_i32 : i32, i32
  }
  func.func @transform_1(%arg0: i32) -> (i32, i32) {
    %c0_i32 = arith.constant 0 : i32
    %c0_i32_0 = arith.constant 0 : i32
    %c0_i32_1 = arith.constant 0 : i32
    return %c0_i32, %c0_i32_0 : i32, i32
  }
  func.func @transform_2(%arg0: i32) -> (i32, i32) {
    %c0_i32 = arith.constant 0 : i32
    %c0_i32_0 = arith.constant 0 : i32
    %c0_i32_1 = arith.constant 0 : i32
    return %c0_i32, %c0_i32_0 : i32, i32
  }
  func.func @transform_3(%arg0: i32) -> (i32, i32) {
    %c0_i32 = arith.constant 0 : i32
    %c0_i32_0 = arith.constant 0 : i32
    %c0_i32_1 = arith.constant 0 : i32
    return %c0_i32, %c0_i32_0 : i32, i32
  }
  func.func @transform_4(%arg0: i32) -> (i32, i32) {
    %c0_i32 = arith.constant 0 : i32
    %c0_i32_0 = arith.constant 0 : i32
    %c0_i32_1 = arith.constant 0 : i32
    return %c0_i32, %c0_i32_0 : i32, i32
  }
  func.func @transform_5(%arg0: i32) -> (i32, i32) {
    %c0_i32 = arith.constant 0 : i32
    %c0_i32_0 = arith.constant 0 : i32
    %c0_i32_1 = arith.constant 0 : i32
    return %c0_i32, %c0_i32_0 : i32, i32
  }
  func.func @transform_6(%arg0: i32) -> (i32, i32) {
    %c0_i32 = arith.constant 0 : i32
    %c0_i32_0 = arith.constant 0 : i32
    %c0_i32_1 = arith.constant 0 : i32
    return %c0_i32, %c0_i32_0 : i32, i32
  }
  func.func @transform_7(%arg0: i32) -> (i32, i32) {
    %c0_i32 = arith.constant 0 : i32
    %c0_i32_0 = arith.constant 0 : i32
    %c0_i32_1 = arith.constant 0 : i32
    return %c0_i32, %c0_i32_0 : i32, i32
  }
  func.func @transform_8(%arg0: i32) -> (i32, i32) {
    %c0_i32 = arith.constant 0 : i32
    %c0_i32_0 = arith.constant 0 : i32
    %c0_i32_1 = arith.constant 0 : i32
    return %c0_i32, %c0_i32_0 : i32, i32
  }
  func.func @transform_9(%arg0: i32) -> (i32, i32) {
    %c0_i32 = arith.constant 0 : i32
    %c0_i32_0 = arith.constant 0 : i32
    %c0_i32_1 = arith.constant 0 : i32
    return %c0_i32, %c0_i32_0 : i32, i32
  }
  func.func @transform_10(%arg0: i32) -> (i32, i32) {
    %c0_i32 = arith.constant 0 : i32
    %c0_i32_0 = arith.constant 0 : i32
    %c0_i32_1 = arith.constant 0 : i32
    return %c0_i32, %c0_i32_0 : i32, i32
  }
  func.func @transform_11(%arg0: i32) -> (i32, i32) {
    %c0_i32 = arith.constant 0 : i32
    %c0_i32_0 = arith.constant 0 : i32
    %c0_i32_1 = arith.constant 0 : i32
    return %c0_i32, %c0_i32_0 : i32, i32
  }
  func.func @transform_12(%arg0: i32) -> (i32, i32) {
    %c0_i32 = arith.constant 0 : i32
    %c0_i32_0 = arith.constant 0 : i32
    %c0_i32_1 = arith.constant 0 : i32
    return %c0_i32, %c0_i32_0 : i32, i32
  }
  func.func @transform_13(%arg0: i32) -> (i32, i32) {
    %c0_i32 = arith.constant 0 : i32
    %c0_i32_0 = arith.constant 0 : i32
    return %arg0, %c0_i32 : i32, i32
  }
}

module attributes {stable_mosaic.version = 11 : i64} {
  func.func @_attn_out_kernel(%arg0: i32, %arg1: memref<32x4xf32, #tpu.memory_space<vmem>>, %arg2: memref<32x4xf32, #tpu.memory_space<vmem>>, %arg3: memref<32x4xf32, #tpu.memory_space<vmem>>, %arg4: memref<4x8x32xf32, #tpu.memory_space<vmem>>, %arg5: memref<4x4x16xf32, #tpu.memory_space<vmem>>, %arg6: memref<1x16xf32, #tpu.memory_space<vmem>>, %arg7: memref<16x128xbf16, #tpu.memory_space<vmem>>, %arg8: memref<1x128xf32, #tpu.memory_space<vmem>>, %arg9: memref<8x128xf32, #tpu.memory_space<vmem>>) attributes {dimension_semantics = [#tpu.dimension_semantics<arbitrary>], iteration_bounds = array<i64: 1>, scalar_prefetch = 0 : i64, scratch_operands = 0 : i64, tpu.core_type = #tpu.core_type<tc>, window_params = [{pipeline_mode = #tpu.pipeline_mode<synchronous>, transform_indices = @transform_0, window_bounds = array<i64: 32, 4>}, {pipeline_mode = #tpu.pipeline_mode<synchronous>, transform_indices = @transform_1, window_bounds = array<i64: 32, 4>}, {pipeline_mode = #tpu.pipeline_mode<synchronous>, transform_indices = @transform_2, window_bounds = array<i64: 32, 4>}, {pipeline_mode = #tpu.pipeline_mode<synchronous>, transform_indices = @transform_3, window_bounds = array<i64: 4, 8, 32>}, {pipeline_mode = #tpu.pipeline_mode<synchronous>, transform_indices = @transform_4, window_bounds = array<i64: 4, 4, 16>}, {pipeline_mode = #tpu.pipeline_mode<synchronous>, transform_indices = @transform_5, window_bounds = array<i64: 1, 16>}, {pipeline_mode = #tpu.pipeline_mode<synchronous>, transform_indices = @transform_6, window_bounds = array<i64: 16, 128>}, {pipeline_mode = #tpu.pipeline_mode<synchronous>, transform_indices = @transform_7, window_bounds = array<i64: 1, 128>}, {pipeline_mode = #tpu.pipeline_mode<synchronous>, transform_indices = @transform_8, window_bounds = array<i64: 8, 128>}]} {
    %c0 = arith.constant 0 : index
    %c0_0 = arith.constant 0 : index
    %0 = vector.load %arg1[%c0, %c0_0] : memref<32x4xf32, #tpu.memory_space<vmem>>, vector<32x4xf32>
    %1 = arith.truncf %0 : vector<32x4xf32> to vector<32x4xbf16>
    %c0_1 = arith.constant 0 : index
    %c0_2 = arith.constant 0 : index
    %2 = vector.load %arg2[%c0_1, %c0_2] : memref<32x4xf32, #tpu.memory_space<vmem>>, vector<32x4xf32>
    %3 = arith.truncf %2 : vector<32x4xf32> to vector<32x4xbf16>
    %c0_3 = arith.constant 0 : index
    %c0_4 = arith.constant 0 : index
    %4 = vector.load %arg3[%c0_3, %c0_4] : memref<32x4xf32, #tpu.memory_space<vmem>>, vector<32x4xf32>
    %5 = arith.truncf %4 : vector<32x4xf32> to vector<32x4xbf16>
    %cst = arith.constant dense<0.000000e+00> : vector<32x32xf32>
    %6 = tpu.matmul %1, %3, %cst {dimension_numbers = #tpu.dot_dimension_numbers<[1], [1], [0], [0], [0, 0, 1, 0], [], []>} : vector<32x4xbf16>, vector<32x4xbf16>, vector<32x32xf32> -> vector<32x32xf32>
    %cst_5 = arith.constant dense<0xFF800000> : vector<32xf32>
    %7 = vector.multi_reduction <maximumf>, %6, %cst_5 [1] : vector<32x32xf32> to vector<32xf32>
    %8 = vector.shape_cast %7 : vector<32xf32> to vector<32x1xf32>
    %9 = vector.broadcast %8 : vector<32x1xf32> to vector<32x32xf32>
    %10 = arith.subf %6, %9 : vector<32x32xf32>
    %11 = math.exp %10 : vector<32x32xf32>
    %cst_6 = arith.constant dense<0.000000e+00> : vector<32xf32>
    %12 = vector.multi_reduction <add>, %11, %cst_6 [1] : vector<32x32xf32> to vector<32xf32>
    %13 = vector.shape_cast %12 : vector<32xf32> to vector<32x1xf32>
    %14 = tpu.reciprocal %13 {approx = true} : vector<32x1xf32> -> vector<32x1xf32>
    %15 = vector.broadcast %14 : vector<32x1xf32> to vector<32x32xf32>
    %16 = arith.mulf %11, %15 : vector<32x32xf32>
    %17 = arith.truncf %16 : vector<32x32xf32> to vector<32x32xbf16>
    %cst_7 = arith.constant dense<0.000000e+00> : vector<32x4xf32>
    %18 = tpu.matmul %17, %5, %cst_7 {dimension_numbers = #tpu.dot_dimension_numbers<[1], [0], [0], [1], [0, 0, 1, 1], [], []>} : vector<32x32xbf16>, vector<32x4xbf16>, vector<32x4xf32> -> vector<32x4xf32>
    %c0_8 = arith.constant 0 : index
    %c0_9 = arith.constant 0 : index
    %19 = vector.load %arg6[%c0_8, %c0_9] : memref<1x16xf32, #tpu.memory_space<vmem>>, vector<1x16xf32>
    %c0_10 = arith.constant 0 : index
    %c0_11 = arith.constant 0 : index
    %c0_12 = arith.constant 0 : index
    %20 = vector.load %arg4[%c0_10, %c0_11, %c0_12] : memref<4x8x32xf32, #tpu.memory_space<vmem>>, vector<1x8x32xf32>
    %21 = vector.shape_cast %20 : vector<1x8x32xf32> to vector<8x32xf32>
    %cst_13 = arith.constant dense<0.000000e+00> : vector<8x4xf32>
    %22 = tpu.matmul %21, %18, %cst_13 {dimension_numbers = #tpu.dot_dimension_numbers<[1], [0], [0], [1], [0, 0, 1, 1], [], []>} : vector<8x32xf32>, vector<32x4xf32>, vector<8x4xf32> -> vector<8x4xf32>
    %c0_14 = arith.constant 0 : index
    %c0_15 = arith.constant 0 : index
    %c0_16 = arith.constant 0 : index
    %23 = vector.load %arg5[%c0_14, %c0_15, %c0_16] : memref<4x4x16xf32, #tpu.memory_space<vmem>>, vector<1x4x16xf32>
    %24 = vector.shape_cast %23 : vector<1x4x16xf32> to vector<4x16xf32>
    %cst_17 = arith.constant dense<0.000000e+00> : vector<8x16xf32>
    %25 = tpu.matmul %22, %24, %cst_17 {dimension_numbers = #tpu.dot_dimension_numbers<[1], [0], [0], [1], [0, 0, 1, 1], [], []>} : vector<8x4xf32>, vector<4x16xf32>, vector<8x16xf32> -> vector<8x16xf32>
    %26 = vector.broadcast %19 : vector<1x16xf32> to vector<8x16xf32>
    %27 = arith.addf %26, %25 : vector<8x16xf32>
    %c1 = arith.constant 1 : index
    %c0_18 = arith.constant 0 : index
    %c0_19 = arith.constant 0 : index
    %28 = vector.load %arg4[%c1, %c0_18, %c0_19] : memref<4x8x32xf32, #tpu.memory_space<vmem>>, vector<1x8x32xf32>
    %29 = vector.shape_cast %28 : vector<1x8x32xf32> to vector<8x32xf32>
    %cst_20 = arith.constant dense<0.000000e+00> : vector<8x4xf32>
    %30 = tpu.matmul %29, %18, %cst_20 {dimension_numbers = #tpu.dot_dimension_numbers<[1], [0], [0], [1], [0, 0, 1, 1], [], []>} : vector<8x32xf32>, vector<32x4xf32>, vector<8x4xf32> -> vector<8x4xf32>
    %c1_21 = arith.constant 1 : index
    %c0_22 = arith.constant 0 : index
    %c0_23 = arith.constant 0 : index
    %31 = vector.load %arg5[%c1_21, %c0_22, %c0_23] : memref<4x4x16xf32, #tpu.memory_space<vmem>>, vector<1x4x16xf32>
    %32 = vector.shape_cast %31 : vector<1x4x16xf32> to vector<4x16xf32>
    %cst_24 = arith.constant dense<0.000000e+00> : vector<8x16xf32>
    %33 = tpu.matmul %30, %32, %cst_24 {dimension_numbers = #tpu.dot_dimension_numbers<[1], [0], [0], [1], [0, 0, 1, 1], [], []>} : vector<8x4xf32>, vector<4x16xf32>, vector<8x16xf32> -> vector<8x16xf32>
    %34 = arith.addf %27, %33 : vector<8x16xf32>
    %c2 = arith.constant 2 : index
    %c0_25 = arith.constant 0 : index
    %c0_26 = arith.constant 0 : index
    %35 = vector.load %arg4[%c2, %c0_25, %c0_26] : memref<4x8x32xf32, #tpu.memory_space<vmem>>, vector<1x8x32xf32>
    %36 = vector.shape_cast %35 : vector<1x8x32xf32> to vector<8x32xf32>
    %cst_27 = arith.constant dense<0.000000e+00> : vector<8x4xf32>
    %37 = tpu.matmul %36, %18, %cst_27 {dimension_numbers = #tpu.dot_dimension_numbers<[1], [0], [0], [1], [0, 0, 1, 1], [], []>} : vector<8x32xf32>, vector<32x4xf32>, vector<8x4xf32> -> vector<8x4xf32>
    %c2_28 = arith.constant 2 : index
    %c0_29 = arith.constant 0 : index
    %c0_30 = arith.constant 0 : index
    %38 = vector.load %arg5[%c2_28, %c0_29, %c0_30] : memref<4x4x16xf32, #tpu.memory_space<vmem>>, vector<1x4x16xf32>
    %39 = vector.shape_cast %38 : vector<1x4x16xf32> to vector<4x16xf32>
    %cst_31 = arith.constant dense<0.000000e+00> : vector<8x16xf32>
    %40 = tpu.matmul %37, %39, %cst_31 {dimension_numbers = #tpu.dot_dimension_numbers<[1], [0], [0], [1], [0, 0, 1, 1], [], []>} : vector<8x4xf32>, vector<4x16xf32>, vector<8x16xf32> -> vector<8x16xf32>
    %41 = arith.addf %34, %40 : vector<8x16xf32>
    %c3 = arith.constant 3 : index
    %c0_32 = arith.constant 0 : index
    %c0_33 = arith.constant 0 : index
    %42 = vector.load %arg4[%c3, %c0_32, %c0_33] : memref<4x8x32xf32, #tpu.memory_space<vmem>>, vector<1x8x32xf32>
    %43 = vector.shape_cast %42 : vector<1x8x32xf32> to vector<8x32xf32>
    %cst_34 = arith.constant dense<0.000000e+00> : vector<8x4xf32>
    %44 = tpu.matmul %43, %18, %cst_34 {dimension_numbers = #tpu.dot_dimension_numbers<[1], [0], [0], [1], [0, 0, 1, 1], [], []>} : vector<8x32xf32>, vector<32x4xf32>, vector<8x4xf32> -> vector<8x4xf32>
    %c3_35 = arith.constant 3 : index
    %c0_36 = arith.constant 0 : index
    %c0_37 = arith.constant 0 : index
    %45 = vector.load %arg5[%c3_35, %c0_36, %c0_37] : memref<4x4x16xf32, #tpu.memory_space<vmem>>, vector<1x4x16xf32>
    %46 = vector.shape_cast %45 : vector<1x4x16xf32> to vector<4x16xf32>
    %cst_38 = arith.constant dense<0.000000e+00> : vector<8x16xf32>
    %47 = tpu.matmul %44, %46, %cst_38 {dimension_numbers = #tpu.dot_dimension_numbers<[1], [0], [0], [1], [0, 0, 1, 1], [], []>} : vector<8x4xf32>, vector<4x16xf32>, vector<8x16xf32> -> vector<8x16xf32>
    %48 = arith.addf %41, %47 : vector<8x16xf32>
    %49 = arith.truncf %48 : vector<8x16xf32> to vector<8x16xbf16>
    %c0_39 = arith.constant 0 : index
    %c0_40 = arith.constant 0 : index
    %50 = vector.load %arg7[%c0_39, %c0_40] : memref<16x128xbf16, #tpu.memory_space<vmem>>, vector<16x128xbf16>
    %cst_41 = arith.constant dense<0.000000e+00> : vector<8x128xf32>
    %51 = tpu.matmul %49, %50, %cst_41 {dimension_numbers = #tpu.dot_dimension_numbers<[1], [0], [0], [1], [0, 0, 1, 1], [], []>} : vector<8x16xbf16>, vector<16x128xbf16>, vector<8x128xf32> -> vector<8x128xf32>
    %c0_42 = arith.constant 0 : index
    %c0_43 = arith.constant 0 : index
    %52 = vector.load %arg8[%c0_42, %c0_43] : memref<1x128xf32, #tpu.memory_space<vmem>>, vector<1x128xf32>
    %53 = vector.broadcast %52 : vector<1x128xf32> to vector<8x128xf32>
    %54 = arith.addf %51, %53 : vector<8x128xf32>
    %c0_44 = arith.constant 0 : index
    %c0_45 = arith.constant 0 : index
    %55 = vector.load %arg9[%c0_44, %c0_45] : memref<8x128xf32, #tpu.memory_space<vmem>>, vector<8x128xf32>
    tpu.vector_store %arg9[%c0_44, %c0_45], %54 {strides = array<i32>} : memref<8x128xf32, #tpu.memory_space<vmem>>, vector<8x128xf32>,
    return
  }
  func.func @transform_0(%arg0: i32) -> (i32, i32) {
    %c0_i32 = arith.constant 0 : i32
    %c0_i32_0 = arith.constant 0 : i32
    %c0_i32_1 = arith.constant 0 : i32
    return %c0_i32, %c0_i32_0 : i32, i32
  }
  func.func @transform_1(%arg0: i32) -> (i32, i32) {
    %c0_i32 = arith.constant 0 : i32
    %c0_i32_0 = arith.constant 0 : i32
    %c0_i32_1 = arith.constant 0 : i32
    return %c0_i32, %c0_i32_0 : i32, i32
  }
  func.func @transform_2(%arg0: i32) -> (i32, i32) {
    %c0_i32 = arith.constant 0 : i32
    %c0_i32_0 = arith.constant 0 : i32
    %c0_i32_1 = arith.constant 0 : i32
    return %c0_i32, %c0_i32_0 : i32, i32
  }
  func.func @transform_3(%arg0: i32) -> (i32, i32, i32) {
    %c0_i32 = arith.constant 0 : i32
    %c0_i32_0 = arith.constant 0 : i32
    %c0_i32_1 = arith.constant 0 : i32
    %c0_i32_2 = arith.constant 0 : i32
    return %c0_i32, %c0_i32_0, %c0_i32_1 : i32, i32, i32
  }
  func.func @transform_4(%arg0: i32) -> (i32, i32, i32) {
    %c0_i32 = arith.constant 0 : i32
    %c0_i32_0 = arith.constant 0 : i32
    %c0_i32_1 = arith.constant 0 : i32
    %c0_i32_2 = arith.constant 0 : i32
    return %c0_i32, %c0_i32_0, %c0_i32_1 : i32, i32, i32
  }
  func.func @transform_5(%arg0: i32) -> (i32, i32) {
    %c0_i32 = arith.constant 0 : i32
    %c0_i32_0 = arith.constant 0 : i32
    %c0_i32_1 = arith.constant 0 : i32
    return %c0_i32, %c0_i32_0 : i32, i32
  }
  func.func @transform_6(%arg0: i32) -> (i32, i32) {
    %c0_i32 = arith.constant 0 : i32
    %c0_i32_0 = arith.constant 0 : i32
    %c0_i32_1 = arith.constant 0 : i32
    return %c0_i32, %c0_i32_0 : i32, i32
  }
  func.func @transform_7(%arg0: i32) -> (i32, i32) {
    %c0_i32 = arith.constant 0 : i32
    %c0_i32_0 = arith.constant 0 : i32
    %c0_i32_1 = arith.constant 0 : i32
    return %c0_i32, %c0_i32_0 : i32, i32
  }
  func.func @transform_8(%arg0: i32) -> (i32, i32) {
    %c0_i32 = arith.constant 0 : i32
    %c0_i32_0 = arith.constant 0 : i32
    %c0_i32_1 = arith.constant 0 : i32
    return %c0_i32, %c0_i32_0 : i32, i32
  }
}

</mosaic_0001>

<llo_original>
// kernel: forward.4
$region0: #{forward.4}
  #allocation0 [shape = 'u32[]', space=smem, size = 0x4, offset = 0x4, fixed_abs, tag = 'smem constant byte address 0x4 - core index']
  #allocation1 [shape = 'u32[144,128]{1,0:T(1,128)}', space=vmem, size = 0x12000, scoped, tag = 'internal scratch']
  %s0 = inlined_call_operand.vmem [shape: f32[8,32], index: 0, kind: input, shape index: {}]
  %s1 = inlined_call_operand.vmem [shape: bf16[32,32], index: 1, kind: input, shape index: {}]
  %s2 = inlined_call_operand.vmem [shape: f32[1,32], index: 2, kind: input, shape index: {}]
  %s3 = inlined_call_operand.vmem [shape: bf16[32,32], index: 3, kind: input, shape index: {}]
  %s4 = inlined_call_operand.vmem [shape: f32[1,32], index: 4, kind: input, shape index: {}]
  %s5 = inlined_call_operand.vmem [shape: f32[1,32], index: 5, kind: input, shape index: {}]
  %s6 = inlined_call_operand.vmem [shape: bf16[32,32], index: 6, kind: input, shape index: {}]
  %s7 = inlined_call_operand.vmem [shape: bf16[32,16], index: 7, kind: input, shape index: {}]
  %s8 = inlined_call_operand.vmem [shape: f32[1,16], index: 8, kind: input, shape index: {}]
  %s9 = inlined_call_operand.vmem [shape: f32[1,16], index: 9, kind: input, shape index: {}]
  %s10 = inlined_call_operand.vmem [shape: bf16[16,16], index: 10, kind: input, shape index: {}]
  %s11 = inlined_call_operand.vmem [shape: bf16[16,48], index: 11, kind: input, shape index: {}]
  %s12 = inlined_call_operand.vmem [shape: f32[1,48], index: 12, kind: input, shape index: {}]
  %s13 = inlined_call_operand.vmem [shape: f32[8,48], index: 13, kind: output, shape index: {}]
  %s14 = sld [smem:[#allocation0]]
  $region62: #{forward.4} parent=0
    _
  %s16 = ssub.s32 1, %s14
  %s17 = scalar_select 0, %s16, %s14
  // Predicated region
  $region2: #{forward.4} parent=0 // pred_check
    _
  $region3: #{forward.4} parent=0 // pred_check_branch
    %19 = sbr.rel (0) target = $region5
  $region4: #{forward.4} parent=0 // pred_region
    _
  $region5: #{forward.4} parent=0 // pred_fallthru
    _
  // Predicated region
  $region6: #{forward.4} parent=0 // pred_check
    _
  $region7: #{forward.4} parent=0 // pred_check_branch
    %21 = sbr.rel (0) target = $region9
  $region8: #{forward.4} parent=0 // pred_region
    _
  $region9: #{forward.4} parent=0 // pred_fallthru
    _
  // Predicated region
  $region10: #{forward.4} parent=0 // pred_check
    _
  $region11: #{forward.4} parent=0 // pred_check_branch
    %23 = sbr.rel (0) target = $region13
  $region12: #{forward.4} parent=0 // pred_region
    _
  $region13: #{forward.4} parent=0 // pred_fallthru
    _
  // Predicated region
  $region14: #{forward.4} parent=0 // pred_check
    _
  $region15: #{forward.4} parent=0 // pred_check_branch
    %25 = sbr.rel (0) target = $region17
  $region16: #{forward.4} parent=0 // pred_region
    _
  $region17: #{forward.4} parent=0 // pred_fallthru
    _
  // Predicated region
  $region18: #{forward.4} parent=0 // pred_check
    _
  $region19: #{forward.4} parent=0 // pred_check_branch
    %27 = sbr.rel (0) target = $region21
  $region20: #{forward.4} parent=0 // pred_region
    _
  $region21: #{forward.4} parent=0 // pred_fallthru
    _
  // Predicated region
  $region22: #{forward.4} parent=0 // pred_check
    _
  $region23: #{forward.4} parent=0 // pred_check_branch
    %29 = sbr.rel (0) target = $region25
  $region24: #{forward.4} parent=0 // pred_region
    _
  $region25: #{forward.4} parent=0 // pred_fallthru
    _
  // Predicated region
  $region26: #{forward.4} parent=0 // pred_check
    _
  $region27: #{forward.4} parent=0 // pred_check_branch
    %31 = sbr.rel (0) target = $region29
  $region28: #{forward.4} parent=0 // pred_region
    _
  $region29: #{forward.4} parent=0 // pred_fallthru
    _
  // Predicated region
  $region30: #{forward.4} parent=0 // pred_check
    _
  $region31: #{forward.4} parent=0 // pred_check_branch
    %33 = sbr.rel (0) target = $region33
  $region32: #{forward.4} parent=0 // pred_region
    _
  $region33: #{forward.4} parent=0 // pred_fallthru
    _
  // Predicated region
  $region34: #{forward.4} parent=0 // pred_check
    _
  $region35: #{forward.4} parent=0 // pred_check_branch
    %35 = sbr.rel (0) target = $region37
  $region36: #{forward.4} parent=0 // pred_region
    _
  $region37: #{forward.4} parent=0 // pred_fallthru
    _
  // Predicated region
  $region38: #{forward.4} parent=0 // pred_check
    _
  $region39: #{forward.4} parent=0 // pred_check_branch
    %37 = sbr.rel (0) target = $region41
  $region40: #{forward.4} parent=0 // pred_region
    _
  $region41: #{forward.4} parent=0 // pred_fallthru
    _
  // Predicated region
  $region42: #{forward.4} parent=0 // pred_check
    _
  $region43: #{forward.4} parent=0 // pred_check_branch
    %39 = sbr.rel (0) target = $region45
  $region44: #{forward.4} parent=0 // pred_region
    _
  $region45: #{forward.4} parent=0 // pred_fallthru
    _
  // Predicated region
  $region46: #{forward.4} parent=0 // pred_check
    _
  $region47: #{forward.4} parent=0 // pred_check_branch
    %41 = sbr.rel (0) target = $region49
  $region48: #{forward.4} parent=0 // pred_region
    _
  $region49: #{forward.4} parent=0 // pred_fallthru
    _
  // Predicated region
  $region50: #{forward.4} parent=0 // pred_check
    _
  $region51: #{forward.4} parent=0 // pred_check_branch
    %43 = sbr.rel (0) target = $region53
  $region52: #{forward.4} parent=0 // pred_region
    _
  $region53: #{forward.4} parent=0 // pred_fallthru
    _
  %v45 = vld [vmem:[%s0] sm:$0xff]
  %v46 = vld [vmem:[%s1] sm:$0xf]
  %v47 = vld [vmem:[%s1 + $0x4] sm:$0xf]
  %v48 = vld [vmem:[%s1 + $0x8] sm:$0xf]
  %v49 = vld [vmem:[%s1 + $0xc] sm:$0xf]
  %v50 = vld [vmem:[%s2] sm:$0x1]
  %v51 = vld [vmem:[%s3] sm:$0xf]
  %v52 = vld [vmem:[%s3 + $0x4] sm:$0xf]
  %v53 = vld [vmem:[%s3 + $0x8] sm:$0xf]
  %v54 = vld [vmem:[%s3 + $0xc] sm:$0xf]
  %v55 = vld [vmem:[%s4] sm:$0x1]
  %v56 = vld [vmem:[%s5] sm:$0x1]
  %v57 = vld [vmem:[%s6] sm:$0xf]
  %v58 = vld [vmem:[%s6 + $0x4] sm:$0xf]
  %v59 = vld [vmem:[%s6 + $0x8] sm:$0xf]
  %v60 = vld [vmem:[%s6 + $0xc] sm:$0xf]
  %v61 = vld [vmem:[%s7] sm:$0xf]
  %v62 = vld [vmem:[%s7 + $0x4] sm:$0xf]
  %v63 = vld [vmem:[%s7 + $0x8] sm:$0xf]
  %v64 = vld [vmem:[%s7 + $0xc] sm:$0xf]
  %v65 = vld [vmem:[%s8] sm:$0x1]
  %v66 = vld [vmem:[%s9] sm:$0x1]
  %v67 = vld [vmem:[%s10] sm:$0xf]
  %v68 = vld [vmem:[%s10 + $0x4] sm:$0xf]
  %v69 = vpack.c.bf16 %v45, %v45
  %v71 = vlaneseq
  %v72 = vshrl.u32 %v71, 7
  %v73 = vsub.s32 0, %v72
  %v74 = vrot.slane %v50, %v73
  %v80 = vunpack.c.l.b16 %v46
  %v81 = vunpack.c.l.b16 %v47
  %v82 = vunpack.c.l.b16 %v48
  %v83 = vunpack.c.l.b16 %v49
  %v84 = vpack.c.b16 %v81, %v80
  %v85 = vpack.c.b16 %v83, %v82
  %vm88 = vcmask 261120
  %v90 = vsel %vm88, %v69, 0
  %92 = vmatprep.subr.bf16.mxu0 0
  %93 = vmatpush1.bf16.msra.mxu0 %v84
  %94 = vmatprep.subr.bf16.mxu0 0
  %95 = vmatpush1.bf16.msra.mxu0 %v85
  %96 = vmatprep.subr.bf16.mxu0 0
  %97 = vmatpush1.bf16.msra.mxu0 0
  %98 = vmatprep.subr.bf16.mxu0 0
  %99 = vmatpush1.bf16.msra.mxu0 0
  %100 = vmatprep.subr.bf16.mxu0 0
  %101 = vmatpush1.bf16.msra.mxu0 0
  %102 = vmatprep.subr.bf16.mxu0 0
  %103 = vmatpush1.bf16.msra.mxu0 0
  %104 = vmatprep.subr.bf16.mxu0 0
  %105 = vmatpush1.bf16.msra.mxu0 0
  %106 = vmatprep.subr.bf16.mxu0 0
  %107 = vmatpush1.bf16.msra.mxu0 0
  %108 = vmatprep.subr.bf16.mxu0 0
  %109 = vmatpush1.bf16.msra.mxu0 0
  %110 = vmatprep.subr.bf16.mxu0 0
  %111 = vmatpush1.bf16.msra.mxu0 0
  %112 = vmatprep.subr.bf16.mxu0 0
  %113 = vmatpush1.bf16.msra.mxu0 0
  %114 = vmatprep.subr.bf16.mxu0 0
  %115 = vmatpush1.bf16.msra.mxu0 0
  %116 = vmatprep.subr.bf16.mxu0 0
  %117 = vmatpush1.bf16.msra.mxu0 0
  %118 = vmatprep.subr.bf16.mxu0 0
  %119 = vmatpush1.bf16.msra.mxu0 0
  %120 = vmatprep.subr.bf16.mxu0 0
  %121 = vmatpush1.bf16.msra.mxu0 0
  %122 = vmatprep.subr.bf16.mxu0 0
  %123 = vmatpush1.bf16.msra.mxu0 0
  %124 = vmatprep.mubr.bf16.mxu0 0
  %125 = vmatmul.mubr.bf16.gmra.mrb[0].mxu0 %v90
  %v126 = vpop.f32.mrb[0].mxu0
  %v127 = vadd.f32 %v74, %v126
  %v128 = vpop.f32.mrb[0].mxu0
  %v129 = vpop.f32.mrb[0].mxu0
  %v130 = vpop.f32.mrb[0].mxu0
  %131 = vdwg.mxu0
  %v132 = vmax.f32 %v127, 0.0
  %v133 = vpack.c.bf16 %v132, %v132
  %v135 = vlaneseq
  %v136 = vshrl.u32 %v135, 7
  %v137 = vsub.s32 0, %v136
  %v138 = vrot.slane %v55, %v137
  %v144 = vunpack.c.l.b16 %v51
  %v145 = vunpack.c.l.b16 %v52
  %v146 = vunpack.c.l.b16 %v53
  %v147 = vunpack.c.l.b16 %v54
  %v148 = vpack.c.b16 %v145, %v144
  %v149 = vpack.c.b16 %v147, %v146
  %v153 = vsel %vm88, %v133, 0
  %155 = vmatprep.subr.bf16.mxu0 0
  %156 = vmatpush1.bf16.msra.mxu0 %v148
  %157 = vmatprep.subr.bf16.mxu0 0
  %158 = vmatpush1.bf16.msra.mxu0 %v149
  %159 = vmatprep.subr.bf16.mxu0 0
  %160 = vmatpush1.bf16.msra.mxu0 0
  %161 = vmatprep.subr.bf16.mxu0 0
  %162 = vmatpush1.bf16.msra.mxu0 0
  %163 = vmatprep.subr.bf16.mxu0 0
  %164 = vmatpush1.bf16.msra.mxu0 0
  %165 = vmatprep.subr.bf16.mxu0 0
  %166 = vmatpush1.bf16.msra.mxu0 0
  %167 = vmatprep.subr.bf16.mxu0 0
  %168 = vmatpush1.bf16.msra.mxu0 0
  %169 = vmatprep.subr.bf16.mxu0 0
  %170 = vmatpush1.bf16.msra.mxu0 0
  %171 = vmatprep.subr.bf16.mxu0 0
  %172 = vmatpush1.bf16.msra.mxu0 0
  %173 = vmatprep.subr.bf16.mxu0 0
  %174 = vmatpush1.bf16.msra.mxu0 0
  %175 = vmatprep.subr.bf16.mxu0 0
  %176 = vmatpush1.bf16.msra.mxu0 0
  %177 = vmatprep.subr.bf16.mxu0 0
  %178 = vmatpush1.bf16.msra.mxu0 0
  %179 = vmatprep.subr.bf16.mxu0 0
  %180 = vmatpush1.bf16.msra.mxu0 0
  %181 = vmatprep.subr.bf16.mxu0 0
  %182 = vmatpush1.bf16.msra.mxu0 0
  %183 = vmatprep.subr.bf16.mxu0 0
  %184 = vmatpush1.bf16.msra.mxu0 0
  %185 = vmatprep.subr.bf16.mxu0 0
  %186 = vmatpush1.bf16.msra.mxu0 0
  %187 = vmatprep.mubr.bf16.mxu0 0
  %188 = vmatmul.mubr.bf16.gmra.mrb[0].mxu0 %v153
  %v189 = vpop.f32.mrb[0].mxu0
  %v190 = vadd.f32 %v138, %v189
  %v191 = vpop.f32.mrb[0].mxu0
  %v192 = vpop.f32.mrb[0].mxu0
  %v193 = vpop.f32.mrb[0].mxu0
  %194 = vdwg.mxu0
  %v196 = vlaneseq
  %v197 = vshrl.u32 %v196, 7
  %v198 = vsub.s32 0, %v197
  %v199 = vrot.slane %v56, %v198
  %v201 = vmul.f32 %v190, %v199
  %v202 = vpack.c.bf16 %v201, %v201
  %v207 = vunpack.c.l.b16 %v57
  %v208 = vunpack.c.l.b16 %v58
  %v209 = vunpack.c.l.b16 %v59
  %v210 = vunpack.c.l.b16 %v60
  %v211 = vpack.c.b16 %v208, %v207
  %v212 = vpack.c.b16 %v210, %v209
  %v216 = vsel %vm88, %v202, 0
  %218 = vmatprep.subr.bf16.mxu0 0
  %219 = vmatpush1.bf16.msra.mxu0 %v211
  %220 = vmatprep.subr.bf16.mxu0 0
  %221 = vmatpush1.bf16.msra.mxu0 %v212
  %222 = vmatprep.subr.bf16.mxu0 0
  %223 = vmatpush1.bf16.msra.mxu0 0
  %224 = vmatprep.subr.bf16.mxu0 0
  %225 = vmatpush1.bf16.msra.mxu0 0
  %226 = vmatprep.subr.bf16.mxu0 0
  %227 = vmatpush1.bf16.msra.mxu0 0
  %228 = vmatprep.subr.bf16.mxu0 0
  %229 = vmatpush1.bf16.msra.mxu0 0
  %230 = vmatprep.subr.bf16.mxu0 0
  %231 = vmatpush1.bf16.msra.mxu0 0
  %232 = vmatprep.subr.bf16.mxu0 0
  %233 = vmatpush1.bf16.msra.mxu0 0
  %234 = vmatprep.subr.bf16.mxu0 0
  %235 = vmatpush1.bf16.msra.mxu0 0
  %236 = vmatprep.subr.bf16.mxu0 0
  %237 = vmatpush1.bf16.msra.mxu0 0
  %238 = vmatprep.subr.bf16.mxu0 0
  %239 = vmatpush1.bf16.msra.mxu0 0
  %240 = vmatprep.subr.bf16.mxu0 0
  %241 = vmatpush1.bf16.msra.mxu0 0
  %242 = vmatprep.subr.bf16.mxu0 0
  %243 = vmatpush1.bf16.msra.mxu0 0
  %244 = vmatprep.subr.bf16.mxu0 0
  %245 = vmatpush1.bf16.msra.mxu0 0
  %246 = vmatprep.subr.bf16.mxu0 0
  %247 = vmatpush1.bf16.msra.mxu0 0
  %248 = vmatprep.subr.bf16.mxu0 0
  %249 = vmatpush1.bf16.msra.mxu0 0
  %250 = vmatprep.mubr.bf16.mxu0 0
  %251 = vmatmul.mubr.bf16.gmra.mrb[0].mxu0 %v216
  %v252 = vpop.f32.mrb[0].mxu0
  %v253 = vadd.f32 0.0, %v252
  %v254 = vpop.f32.mrb[0].mxu0
  %v255 = vpop.f32.mrb[0].mxu0
  %v256 = vpop.f32.mrb[0].mxu0
  %257 = vdwg.mxu0
  %v258 = vmul.f32 %v253, 0.5
  %v259 = vmul.f32 %v253, 0.70710677
  %v260 = verf.f32.pop %v259
  %v261 = vadd.f32 %v260, 1.0
  %v262 = vmul.f32 %v258, %v261
  %v263 = vpack.c.bf16 %v262, %v262
  %v265 = vlaneseq
  %v266 = vshrl.u32 %v265, 7
  %v267 = vsub.s32 0, %v266
  %v268 = vrot.slane %v65, %v267
  %v274 = vunpack.c.l.b16 %v61
  %v275 = vunpack.c.l.b16 %v62
  %v276 = vunpack.c.l.b16 %v63
  %v277 = vunpack.c.l.b16 %v64
  %v278 = vpack.c.b16 %v275, %v274
  %v279 = vpack.c.b16 %v277, %v276
  %v283 = vsel %vm88, %v263, 0
  %285 = vmatprep.subr.bf16.mxu0 0
  %286 = vmatpush1.bf16.msra.mxu0 %v278
  %287 = vmatprep.subr.bf16.mxu0 0
  %288 = vmatpush1.bf16.msra.mxu0 %v279
  %289 = vmatprep.subr.bf16.mxu0 0
  %290 = vmatpush1.bf16.msra.mxu0 0
  %291 = vmatprep.subr.bf16.mxu0 0
  %292 = vmatpush1.bf16.msra.mxu0 0
  %293 = vmatprep.subr.bf16.mxu0 0
  %294 = vmatpush1.bf16.msra.mxu0 0
  %295 = vmatprep.subr.bf16.mxu0 0
  %296 = vmatpush1.bf16.msra.mxu0 0
  %297 = vmatprep.subr.bf16.mxu0 0
  %298 = vmatpush1.bf16.msra.mxu0 0
  %299 = vmatprep.subr.bf16.mxu0 0
  %300 = vmatpush1.bf16.msra.mxu0 0
  %301 = vmatprep.subr.bf16.mxu0 0
  %302 = vmatpush1.bf16.msra.mxu0 0
  %303 = vmatprep.subr.bf16.mxu0 0
  %304 = vmatpush1.bf16.msra.mxu0 0
  %305 = vmatprep.subr.bf16.mxu0 0
  %306 = vmatpush1.bf16.msra.mxu0 0
  %307 = vmatprep.subr.bf16.mxu0 0
  %308 = vmatpush1.bf16.msra.mxu0 0
  %309 = vmatprep.subr.bf16.mxu0 0
  %310 = vmatpush1.bf16.msra.mxu0 0
  %311 = vmatprep.subr.bf16.mxu0 0
  %312 = vmatpush1.bf16.msra.mxu0 0
  %313 = vmatprep.subr.bf16.mxu0 0
  %314 = vmatpush1.bf16.msra.mxu0 0
  %315 = vmatprep.subr.bf16.mxu0 0
  %316 = vmatpush1.bf16.msra.mxu0 0
  %317 = vmatprep.mubr.bf16.mxu0 0
  %318 = vmatmul.mubr.bf16.gmra.mrb[0].mxu0 %v283
  %v319 = vpop.f32.mrb[0].mxu0
  %v320 = vadd.f32 %v268, %v319
  %v321 = vpop.f32.mrb[0].mxu0
  %v322 = vpop.f32.mrb[0].mxu0
  %v323 = vpop.f32.mrb[0].mxu0
  %324 = vdwg.mxu0
  %v325 = vmax.f32 %v320, 0.0
  %v327 = vlaneseq
  %v328 = vshrl.u32 %v327, 7
  %v329 = vsub.s32 0, %v328
  %v330 = vrot.slane %v66, %v329
  %v332 = vmul.f32 %v325, %v330
  %v333 = vpack.c.bf16 %v332, %v332
  %v336 = vunpack.c.l.b16 %v67
  %v337 = vunpack.c.l.b16 %v68
  %v338 = vpack.c.b16 %v337, %v336
  %vm340 = vcmask 130048
  %v342 = vsel %vm340, %v333, 0
  %344 = vmatprep.subr.bf16.mxu0 0
  %345 = vmatpush1.bf16.msra.mxu0 %v338
  %346 = vmatprep.subr.bf16.mxu0 0
  %347 = vmatpush1.bf16.msra.mxu0 0
  %348 = vmatprep.subr.bf16.mxu0 0
  %349 = vmatpush1.bf16.msra.mxu0 0
  %350 = vmatprep.subr.bf16.mxu0 0
  %351 = vmatpush1.bf16.msra.mxu0 0
  %352 = vmatprep.subr.bf16.mxu0 0
  %353 = vmatpush1.bf16.msra.mxu0 0
  %354 = vmatprep.subr.bf16.mxu0 0
  %355 = vmatpush1.bf16.msra.mxu0 0
  %356 = vmatprep.subr.bf16.mxu0 0
  %357 = vmatpush1.bf16.msra.mxu0 0
  %358 = vmatprep.subr.bf16.mxu0 0
  %359 = vmatpush1.bf16.msra.mxu0 0
  %360 = vmatprep.subr.bf16.mxu0 0
  %361 = vmatpush1.bf16.msra.mxu0 0
  %362 = vmatprep.subr.bf16.mxu0 0
  %363 = vmatpush1.bf16.msra.mxu0 0
  %364 = vmatprep.subr.bf16.mxu0 0
  %365 = vmatpush1.bf16.msra.mxu0 0
  %366 = vmatprep.subr.bf16.mxu0 0
  %367 = vmatpush1.bf16.msra.mxu0 0
  %368 = vmatprep.subr.bf16.mxu0 0
  %369 = vmatpush1.bf16.msra.mxu0 0
  %370 = vmatprep.subr.bf16.mxu0 0
  %371 = vmatpush1.bf16.msra.mxu0 0
  %372 = vmatprep.subr.bf16.mxu0 0
  %373 = vmatpush1.bf16.msra.mxu0 0
  %374 = vmatprep.subr.bf16.mxu0 0
  %375 = vmatpush1.bf16.msra.mxu0 0
  %376 = vmatprep.mubr.bf16.mxu0 0
  %377 = vmatmul.mubr.bf16.gmra.mrb[0].mxu0 %v342
  %v378 = vpop.f32.mrb[0].mxu0
  %v379 = vadd.f32 0.0, %v378
  %v380 = vpop.f32.mrb[0].mxu0
  %v381 = vpop.f32.mrb[0].mxu0
  %v382 = vpop.f32.mrb[0].mxu0
  %383 = vdwg.mxu0
  %v384 = vmul.f32 %v379, 0.5
  %v385 = vmul.f32 %v379, 0.70710677
  %v386 = verf.f32.pop %v385
  %v387 = vadd.f32 %v386, 1.0
  %v388 = vmul.f32 %v384, %v387
  %v389 = vpack.c.bf16 %v388, %v388
  %v390 = vld [vmem:[%s11] sm:$0xf]
  %v391 = vld [vmem:[%s11 + $0x4] sm:$0xf]
  %v392 = vld [vmem:[%s12] sm:$0x1]
  %v394 = vlaneseq
  %v395 = vshrl.u32 %v394, 7
  %v396 = vsub.s32 0, %v395
  %v397 = vrot.slane %v392, %v396
  %v401 = vunpack.c.l.b16 %v390
  %v402 = vunpack.c.l.b16 %v391
  %v403 = vpack.c.b16 %v402, %v401
  %v406 = vsel %vm340, %v389, 0
  %408 = vmatprep.subr.bf16.mxu0 0
  %409 = vmatpush1.bf16.msra.mxu0 %v403
  %410 = vmatprep.subr.bf16.mxu0 0
  %411 = vmatpush1.bf16.msra.mxu0 0
  %412 = vmatprep.subr.bf16.mxu0 0
  %413 = vmatpush1.bf16.msra.mxu0 0
  %414 = vmatprep.subr.bf16.mxu0 0
  %415 = vmatpush1.bf16.msra.mxu0 0
  %416 = vmatprep.subr.bf16.mxu0 0
  %417 = vmatpush1.bf16.msra.mxu0 0
  %418 = vmatprep.subr.bf16.mxu0 0
  %419 = vmatpush1.bf16.msra.mxu0 0
  %420 = vmatprep.subr.bf16.mxu0 0
  %421 = vmatpush1.bf16.msra.mxu0 0
  %422 = vmatprep.subr.bf16.mxu0 0
  %423 = vmatpush1.bf16.msra.mxu0 0
  %424 = vmatprep.subr.bf16.mxu0 0
  %425 = vmatpush1.bf16.msra.mxu0 0
  %426 = vmatprep.subr.bf16.mxu0 0
  %427 = vmatpush1.bf16.msra.mxu0 0
  %428 = vmatprep.subr.bf16.mxu0 0
  %429 = vmatpush1.bf16.msra.mxu0 0
  %430 = vmatprep.subr.bf16.mxu0 0
  %431 = vmatpush1.bf16.msra.mxu0 0
  %432 = vmatprep.subr.bf16.mxu0 0
  %433 = vmatpush1.bf16.msra.mxu0 0
  %434 = vmatprep.subr.bf16.mxu0 0
  %435 = vmatpush1.bf16.msra.mxu0 0
  %436 = vmatprep.subr.bf16.mxu0 0
  %437 = vmatpush1.bf16.msra.mxu0 0
  %438 = vmatprep.subr.bf16.mxu0 0
  %439 = vmatpush1.bf16.msra.mxu0 0
  %440 = vmatprep.mubr.bf16.mxu0 0
  %441 = vmatmul.mubr.bf16.gmra.mrb[0].mxu0 %v406
  %v442 = vpop.f32.mrb[0].mxu0
  %v443 = vadd.f32 %v397, %v442
  %v444 = vpop.f32.mrb[0].mxu0
  %v445 = vpop.f32.mrb[0].mxu0
  %v446 = vpop.f32.mrb[0].mxu0
  %447 = vdwg.mxu0
  %vm448 = vcmask 392192
  %449 = vst.msk [vmem:[%s13] sm:$0xff] %vm448, %v443
  // Predicated region
  $region54: #{forward.4} parent=0 // pred_check
    _
  $region55: #{forward.4} parent=0 // pred_check_branch
    %451 = sbr.rel (0) target = $region57
  $region56: #{forward.4} parent=0 // pred_region
    _
  $region57: #{forward.4} parent=0 // pred_fallthru
    _
  // Predicated region
  $region58: #{forward.4} parent=0 // pred_check
    _
  $region59: #{forward.4} parent=0 // pred_check_branch
    %453 = sbr.rel (0) target = $region61
  $region60: #{forward.4} parent=0 // pred_region
    _
  $region61: #{forward.4} parent=0 // pred_fallthru
    _

// kernel: forward.3
$region0: #{forward.3}
  #allocation0 [shape = 'u32[]', space=smem, size = 0x4, offset = 0x4, fixed_abs, tag = 'smem constant byte address 0x4 - core index']
  #allocation1 [shape = 'u32[144,128]{1,0:T(1,128)}', space=vmem, size = 0x12000, scoped, tag = 'internal scratch']
  %s0 = inlined_call_operand.vmem [shape: f32[16,64], index: 0, kind: input, shape index: {}]
  %s1 = inlined_call_operand.vmem [shape: bf16[64,64], index: 1, kind: input, shape index: {}]
  %s2 = inlined_call_operand.vmem [shape: f32[1,64], index: 2, kind: input, shape index: {}]
  %s3 = inlined_call_operand.vmem [shape: bf16[64,64], index: 3, kind: input, shape index: {}]
  %s4 = inlined_call_operand.vmem [shape: f32[1,64], index: 4, kind: input, shape index: {}]
  %s5 = inlined_call_operand.vmem [shape: f32[1,64], index: 5, kind: input, shape index: {}]
  %s6 = inlined_call_operand.vmem [shape: bf16[64,64], index: 6, kind: input, shape index: {}]
  %s7 = inlined_call_operand.vmem [shape: bf16[64,16], index: 7, kind: input, shape index: {}]
  %s8 = inlined_call_operand.vmem [shape: f32[1,16], index: 8, kind: input, shape index: {}]
  %s9 = inlined_call_operand.vmem [shape: f32[1,16], index: 9, kind: input, shape index: {}]
  %s10 = inlined_call_operand.vmem [shape: bf16[16,16], index: 10, kind: input, shape index: {}]
  %s11 = inlined_call_operand.vmem [shape: f32[16,16], index: 11, kind: output, shape index: {}]
  %s12 = sld [smem:[#allocation0]]
  $region54: #{forward.3} parent=0
    _
  %s14 = ssub.s32 1, %s12
  %s15 = scalar_select 0, %s14, %s12
  // Predicated region
  $region2: #{forward.3} parent=0 // pred_check
    _
  $region3: #{forward.3} parent=0 // pred_check_branch
    %17 = sbr.rel (0) target = $region5
  $region4: #{forward.3} parent=0 // pred_region
    _
  $region5: #{forward.3} parent=0 // pred_fallthru
    _
  // Predicated region
  $region6: #{forward.3} parent=0 // pred_check
    _
  $region7: #{forward.3} parent=0 // pred_check_branch
    %19 = sbr.rel (0) target = $region9
  $region8: #{forward.3} parent=0 // pred_region
    _
  $region9: #{forward.3} parent=0 // pred_fallthru
    _
  // Predicated region
  $region10: #{forward.3} parent=0 // pred_check
    _
  $region11: #{forward.3} parent=0 // pred_check_branch
    %21 = sbr.rel (0) target = $region13
  $region12: #{forward.3} parent=0 // pred_region
    _
  $region13: #{forward.3} parent=0 // pred_fallthru
    _
  // Predicated region
  $region14: #{forward.3} parent=0 // pred_check
    _
  $region15: #{forward.3} parent=0 // pred_check_branch
    %23 = sbr.rel (0) target = $region17
  $region16: #{forward.3} parent=0 // pred_region
    _
  $region17: #{forward.3} parent=0 // pred_fallthru
    _
  // Predicated region
  $region18: #{forward.3} parent=0 // pred_check
    _
  $region19: #{forward.3} parent=0 // pred_check_branch
    %25 = sbr.rel (0) target = $region21
  $region20: #{forward.3} parent=0 // pred_region
    _
  $region21: #{forward.3} parent=0 // pred_fallthru
    _
  // Predicated region
  $region22: #{forward.3} parent=0 // pred_check
    _
  $region23: #{forward.3} parent=0 // pred_check_branch
    %27 = sbr.rel (0) target = $region25
  $region24: #{forward.3} parent=0 // pred_region
    _
  $region25: #{forward.3} parent=0 // pred_fallthru
    _
  // Predicated region
  $region26: #{forward.3} parent=0 // pred_check
    _
  $region27: #{forward.3} parent=0 // pred_check_branch
    %29 = sbr.rel (0) target = $region29
  $region28: #{forward.3} parent=0 // pred_region
    _
  $region29: #{forward.3} parent=0 // pred_fallthru
    _
  // Predicated region
  $region30: #{forward.3} parent=0 // pred_check
    _
  $region31: #{forward.3} parent=0 // pred_check_branch
    %31 = sbr.rel (0) target = $region33
  $region32: #{forward.3} parent=0 // pred_region
    _
  $region33: #{forward.3} parent=0 // pred_fallthru
    _
  // Predicated region
  $region34: #{forward.3} parent=0 // pred_check
    _
  $region35: #{forward.3} parent=0 // pred_check_branch
    %33 = sbr.rel (0) target = $region37
  $region36: #{forward.3} parent=0 // pred_region
    _
  $region37: #{forward.3} parent=0 // pred_fallthru
    _
  // Predicated region
  $region38: #{forward.3} parent=0 // pred_check
    _
  $region39: #{forward.3} parent=0 // pred_check_branch
    %35 = sbr.rel (0) target = $region41
  $region40: #{forward.3} parent=0 // pred_region
    _
  $region41: #{forward.3} parent=0 // pred_fallthru
    _
  // Predicated region
  $region42: #{forward.3} parent=0 // pred_check
    _
  $region43: #{forward.3} parent=0 // pred_check_branch
    %37 = sbr.rel (0) target = $region45
  $region44: #{forward.3} parent=0 // pred_region
    _
  $region45: #{forward.3} parent=0 // pred_fallthru
    _
  %v39 = vld [vmem:[%s0] sm:$0xff]
  %v40 = vld [vmem:[%s0 + $0x8] sm:$0xff]
  %v41 = vld [vmem:[%s1] sm:$0xf]
  %v42 = vld [vmem:[%s1 + $0x4] sm:$0xf]
  %v43 = vld [vmem:[%s1 + $0x8] sm:$0xf]
  %v44 = vld [vmem:[%s1 + $0xc] sm:$0xf]
  %v45 = vld [vmem:[%s1 + $0x10] sm:$0xf]
  %v46 = vld [vmem:[%s1 + $0x14] sm:$0xf]
  %v47 = vld [vmem:[%s1 + $0x18] sm:$0xf]
  %v48 = vld [vmem:[%s1 + $0x1c] sm:$0xf]
  %v49 = vld [vmem:[%s2] sm:$0x1]
  %v50 = vld [vmem:[%s3] sm:$0xf]
  %v51 = vld [vmem:[%s3 + $0x4] sm:$0xf]
  %v52 = vld [vmem:[%s3 + $0x8] sm:$0xf]
  %v53 = vld [vmem:[%s3 + $0xc] sm:$0xf]
  %v54 = vld [vmem:[%s3 + $0x10] sm:$0xf]
  %v55 = vld [vmem:[%s3 + $0x14] sm:$0xf]
  %v56 = vld [vmem:[%s3 + $0x18] sm:$0xf]
  %v57 = vld [vmem:[%s3 + $0x1c] sm:$0xf]
  %v58 = vld [vmem:[%s4] sm:$0x1]
  %v59 = vld [vmem:[%s5] sm:$0x1]
  %v60 = vld [vmem:[%s6] sm:$0xf]
  %v61 = vld [vmem:[%s6 + $0x4] sm:$0xf]
  %v62 = vld [vmem:[%s6 + $0x8] sm:$0xf]
  %v63 = vld [vmem:[%s6 + $0xc] sm:$0xf]
  %v64 = vld [vmem:[%s6 + $0x10] sm:$0xf]
  %v65 = vld [vmem:[%s6 + $0x14] sm:$0xf]
  %v66 = vld [vmem:[%s6 + $0x18] sm:$0xf]
  %v67 = vld [vmem:[%s6 + $0x1c] sm:$0xf]
  %v68 = vld [vmem:[%s7] sm:$0xf]
  %v69 = vld [vmem:[%s7 + $0x4] sm:$0xf]
  %v70 = vld [vmem:[%s7 + $0x8] sm:$0xf]
  %v71 = vld [vmem:[%s7 + $0xc] sm:$0xf]
  %v72 = vld [vmem:[%s7 + $0x10] sm:$0xf]
  %v73 = vld [vmem:[%s7 + $0x14] sm:$0xf]
  %v74 = vld [vmem:[%s7 + $0x18] sm:$0xf]
  %v75 = vld [vmem:[%s7 + $0x1c] sm:$0xf]
  %v76 = vld [vmem:[%s8] sm:$0x1]
  %v77 = vld [vmem:[%s9] sm:$0x1]
  %v78 = vld [vmem:[%s10] sm:$0xf]
  %v79 = vld [vmem:[%s10 + $0x4] sm:$0xf]
  %v80 = vpack.c.bf16 %v40, %v39
  %v82 = vlaneseq
  %v83 = vshrl.u32 %v82, 7
  %v84 = vsub.s32 0, %v83
  %v85 = vrot.slane %v49, %v84
  %v95 = vunpack.c.l.b16 %v41
  %v96 = vunpack.c.l.b16 %v42
  %v97 = vunpack.c.l.b16 %v43
  %v98 = vunpack.c.l.b16 %v44
  %v99 = vunpack.c.l.b16 %v45
  %v100 = vunpack.c.l.b16 %v46
  %v101 = vunpack.c.l.b16 %v47
  %v102 = vunpack.c.l.b16 %v48
  %v103 = vpack.c.b16 %v96, %v95
  %v104 = vpack.c.b16 %v98, %v97
  %v105 = vpack.c.b16 %v100, %v99
  %v106 = vpack.c.b16 %v102, %v101
  %vm111 = vcmask 523264
  %v113 = vsel %vm111, %v80, 0
  %115 = vmatprep.subr.bf16.mxu0 0
  %116 = vmatpush1.bf16.msra.mxu0 %v103
  %117 = vmatprep.subr.bf16.mxu0 0
  %118 = vmatpush1.bf16.msra.mxu0 %v104
  %119 = vmatprep.subr.bf16.mxu0 0
  %120 = vmatpush1.bf16.msra.mxu0 %v105
  %121 = vmatprep.subr.bf16.mxu0 0
  %122 = vmatpush1.bf16.msra.mxu0 %v106
  %123 = vmatprep.subr.bf16.mxu0 0
  %124 = vmatpush1.bf16.msra.mxu0 0
  %125 = vmatprep.subr.bf16.mxu0 0
  %126 = vmatpush1.bf16.msra.mxu0 0
  %127 = vmatprep.subr.bf16.mxu0 0
  %128 = vmatpush1.bf16.msra.mxu0 0
  %129 = vmatprep.subr.bf16.mxu0 0
  %130 = vmatpush1.bf16.msra.mxu0 0
  %131 = vmatprep.subr.bf16.mxu0 0
  %132 = vmatpush1.bf16.msra.mxu0 0
  %133 = vmatprep.subr.bf16.mxu0 0
  %134 = vmatpush1.bf16.msra.mxu0 0
  %135 = vmatprep.subr.bf16.mxu0 0
  %136 = vmatpush1.bf16.msra.mxu0 0
  %137 = vmatprep.subr.bf16.mxu0 0
  %138 = vmatpush1.bf16.msra.mxu0 0
  %139 = vmatprep.subr.bf16.mxu0 0
  %140 = vmatpush1.bf16.msra.mxu0 0
  %141 = vmatprep.subr.bf16.mxu0 0
  %142 = vmatpush1.bf16.msra.mxu0 0
  %143 = vmatprep.subr.bf16.mxu0 0
  %144 = vmatpush1.bf16.msra.mxu0 0
  %145 = vmatprep.subr.bf16.mxu0 0
  %146 = vmatpush1.bf16.msra.mxu0 0
  %147 = vmatprep.mubr.bf16.mxu0 0
  %148 = vmatmul.mubr.bf16.gmra.mrb[0].mxu0 %v113
  %v149 = vpop.f32.mrb[0].mxu0
  %v150 = vadd.f32 %v85, %v149
  %v151 = vpop.f32.mrb[0].mxu0
  %v152 = vpop.f32.mrb[0].mxu0
  %v153 = vadd.f32 %v85, %v152
  %v154 = vpop.f32.mrb[0].mxu0
  %155 = vdwg.mxu0
  %v156 = vmax.f32 %v150, 0.0
  %v157 = vmax.f32 %v153, 0.0
  %v158 = vpack.c.bf16 %v157, %v156
  %v160 = vlaneseq
  %v161 = vshrl.u32 %v160, 7
  %v162 = vsub.s32 0, %v161
  %v163 = vrot.slane %v58, %v162
  %v173 = vunpack.c.l.b16 %v50
  %v174 = vunpack.c.l.b16 %v51
  %v175 = vunpack.c.l.b16 %v52
  %v176 = vunpack.c.l.b16 %v53
  %v177 = vunpack.c.l.b16 %v54
  %v178 = vunpack.c.l.b16 %v55
  %v179 = vunpack.c.l.b16 %v56
  %v180 = vunpack.c.l.b16 %v57
  %v181 = vpack.c.b16 %v174, %v173
  %v182 = vpack.c.b16 %v176, %v175
  %v183 = vpack.c.b16 %v178, %v177
  %v184 = vpack.c.b16 %v180, %v179
  %v190 = vsel %vm111, %v158, 0
  %192 = vmatprep.subr.bf16.mxu0 0
  %193 = vmatpush1.bf16.msra.mxu0 %v181
  %194 = vmatprep.subr.bf16.mxu0 0
  %195 = vmatpush1.bf16.msra.mxu0 %v182
  %196 = vmatprep.subr.bf16.mxu0 0
  %197 = vmatpush1.bf16.msra.mxu0 %v183
  %198 = vmatprep.subr.bf16.mxu0 0
  %199 = vmatpush1.bf16.msra.mxu0 %v184
  %200 = vmatprep.subr.bf16.mxu0 0
  %201 = vmatpush1.bf16.msra.mxu0 0
  %202 = vmatprep.subr.bf16.mxu0 0
  %203 = vmatpush1.bf16.msra.mxu0 0
  %204 = vmatprep.subr.bf16.mxu0 0
  %205 = vmatpush1.bf16.msra.mxu0 0
  %206 = vmatprep.subr.bf16.mxu0 0
  %207 = vmatpush1.bf16.msra.mxu0 0
  %208 = vmatprep.subr.bf16.mxu0 0
  %209 = vmatpush1.bf16.msra.mxu0 0
  %210 = vmatprep.subr.bf16.mxu0 0
  %211 = vmatpush1.bf16.msra.mxu0 0
  %212 = vmatprep.subr.bf16.mxu0 0
  %213 = vmatpush1.bf16.msra.mxu0 0
  %214 = vmatprep.subr.bf16.mxu0 0
  %215 = vmatpush1.bf16.msra.mxu0 0
  %216 = vmatprep.subr.bf16.mxu0 0
  %217 = vmatpush1.bf16.msra.mxu0 0
  %218 = vmatprep.subr.bf16.mxu0 0
  %219 = vmatpush1.bf16.msra.mxu0 0
  %220 = vmatprep.subr.bf16.mxu0 0
  %221 = vmatpush1.bf16.msra.mxu0 0
  %222 = vmatprep.subr.bf16.mxu0 0
  %223 = vmatpush1.bf16.msra.mxu0 0
  %224 = vmatprep.mubr.bf16.mxu0 0
  %225 = vmatmul.mubr.bf16.gmra.mrb[0].mxu0 %v190
  %v226 = vpop.f32.mrb[0].mxu0
  %v227 = vadd.f32 %v163, %v226
  %v228 = vpop.f32.mrb[0].mxu0
  %v229 = vpop.f32.mrb[0].mxu0
  %v230 = vadd.f32 %v163, %v229
  %v231 = vpop.f32.mrb[0].mxu0
  %232 = vdwg.mxu0
  %v234 = vlaneseq
  %v235 = vshrl.u32 %v234, 7
  %v236 = vsub.s32 0, %v235
  %v237 = vrot.slane %v59, %v236
  %v239 = vmul.f32 %v227, %v237
  %v240 = vmul.f32 %v230, %v237
  %v241 = vpack.c.bf16 %v240, %v239
  %v250 = vunpack.c.l.b16 %v60
  %v251 = vunpack.c.l.b16 %v61
  %v252 = vunpack.c.l.b16 %v62
  %v253 = vunpack.c.l.b16 %v63
  %v254 = vunpack.c.l.b16 %v64
  %v255 = vunpack.c.l.b16 %v65
  %v256 = vunpack.c.l.b16 %v66
  %v257 = vunpack.c.l.b16 %v67
  %v258 = vpack.c.b16 %v251, %v250
  %v259 = vpack.c.b16 %v253, %v252
  %v260 = vpack.c.b16 %v255, %v254
  %v261 = vpack.c.b16 %v257, %v256
  %v267 = vsel %vm111, %v241, 0
  %269 = vmatprep.subr.bf16.mxu0 0
  %270 = vmatpush1.bf16.msra.mxu0 %v258
  %271 = vmatprep.subr.bf16.mxu0 0
  %272 = vmatpush1.bf16.msra.mxu0 %v259
  %273 = vmatprep.subr.bf16.mxu0 0
  %274 = vmatpush1.bf16.msra.mxu0 %v260
  %275 = vmatprep.subr.bf16.mxu0 0
  %276 = vmatpush1.bf16.msra.mxu0 %v261
  %277 = vmatprep.subr.bf16.mxu0 0
  %278 = vmatpush1.bf16.msra.mxu0 0
  %279 = vmatprep.subr.bf16.mxu0 0
  %280 = vmatpush1.bf16.msra.mxu0 0
  %281 = vmatprep.subr.bf16.mxu0 0
  %282 = vmatpush1.bf16.msra.mxu0 0
  %283 = vmatprep.subr.bf16.mxu0 0
  %284 = vmatpush1.bf16.msra.mxu0 0
  %285 = vmatprep.subr.bf16.mxu0 0
  %286 = vmatpush1.bf16.msra.mxu0 0
  %287 = vmatprep.subr.bf16.mxu0 0
  %288 = vmatpush1.bf16.msra.mxu0 0
  %289 = vmatprep.subr.bf16.mxu0 0
  %290 = vmatpush1.bf16.msra.mxu0 0
  %291 = vmatprep.subr.bf16.mxu0 0
  %292 = vmatpush1.bf16.msra.mxu0 0
  %293 = vmatprep.subr.bf16.mxu0 0
  %294 = vmatpush1.bf16.msra.mxu0 0
  %295 = vmatprep.subr.bf16.mxu0 0
  %296 = vmatpush1.bf16.msra.mxu0 0
  %297 = vmatprep.subr.bf16.mxu0 0
  %298 = vmatpush1.bf16.msra.mxu0 0
  %299 = vmatprep.subr.bf16.mxu0 0
  %300 = vmatpush1.bf16.msra.mxu0 0
  %301 = vmatprep.mubr.bf16.mxu0 0
  %302 = vmatmul.mubr.bf16.gmra.mrb[0].mxu0 %v267
  %v303 = vpop.f32.mrb[0].mxu0
  %v304 = vadd.f32 0.0, %v303
  %v305 = vpop.f32.mrb[0].mxu0
  %v306 = vpop.f32.mrb[0].mxu0
  %v307 = vadd.f32 0.0, %v306
  %v308 = vpop.f32.mrb[0].mxu0
  %309 = vdwg.mxu0
  %v310 = vmul.f32 %v304, 0.5
  %v311 = vmul.f32 %v307, 0.5
  %v312 = vmul.f32 %v304, 0.70710677
  %v313 = vmul.f32 %v307, 0.70710677
  %v314 = verf.f32.pop %v312
  %v315 = verf.f32.pop %v313
  %v316 = vadd.f32 %v314, 1.0
  %v317 = vadd.f32 %v315, 1.0
  %v318 = vmul.f32 %v310, %v316
  %v319 = vmul.f32 %v311, %v317
  %v320 = vpack.c.bf16 %v319, %v318
  %v322 = vlaneseq
  %v323 = vshrl.u32 %v322, 7
  %v324 = vsub.s32 0, %v323
  %v325 = vrot.slane %v76, %v324
  %v335 = vunpack.c.l.b16 %v68
  %v336 = vunpack.c.l.b16 %v69
  %v337 = vunpack.c.l.b16 %v70
  %v338 = vunpack.c.l.b16 %v71
  %v339 = vunpack.c.l.b16 %v72
  %v340 = vunpack.c.l.b16 %v73
  %v341 = vunpack.c.l.b16 %v74
  %v342 = vunpack.c.l.b16 %v75
  %v343 = vpack.c.b16 %v336, %v335
  %v344 = vpack.c.b16 %v338, %v337
  %v345 = vpack.c.b16 %v340, %v339
  %v346 = vpack.c.b16 %v342, %v341
  %v352 = vsel %vm111, %v320, 0
  %354 = vmatprep.subr.bf16.mxu0 0
  %355 = vmatpush1.bf16.msra.mxu0 %v343
  %356 = vmatprep.subr.bf16.mxu0 0
  %357 = vmatpush1.bf16.msra.mxu0 %v344
  %358 = vmatprep.subr.bf16.mxu0 0
  %359 = vmatpush1.bf16.msra.mxu0 %v345
  %360 = vmatprep.subr.bf16.mxu0 0
  %361 = vmatpush1.bf16.msra.mxu0 %v346
  %362 = vmatprep.subr.bf16.mxu0 0
  %363 = vmatpush1.bf16.msra.mxu0 0
  %364 = vmatprep.subr.bf16.mxu0 0
  %365 = vmatpush1.bf16.msra.mxu0 0
  %366 = vmatprep.subr.bf16.mxu0 0
  %367 = vmatpush1.bf16.msra.mxu0 0
  %368 = vmatprep.subr.bf16.mxu0 0
  %369 = vmatpush1.bf16.msra.mxu0 0
  %370 = vmatprep.subr.bf16.mxu0 0
  %371 = vmatpush1.bf16.msra.mxu0 0
  %372 = vmatprep.subr.bf16.mxu0 0
  %373 = vmatpush1.bf16.msra.mxu0 0
  %374 = vmatprep.subr.bf16.mxu0 0
  %375 = vmatpush1.bf16.msra.mxu0 0
  %376 = vmatprep.subr.bf16.mxu0 0
  %377 = vmatpush1.bf16.msra.mxu0 0
  %378 = vmatprep.subr.bf16.mxu0 0
  %379 = vmatpush1.bf16.msra.mxu0 0
  %380 = vmatprep.subr.bf16.mxu0 0
  %381 = vmatpush1.bf16.msra.mxu0 0
  %382 = vmatprep.subr.bf16.mxu0 0
  %383 = vmatpush1.bf16.msra.mxu0 0
  %384 = vmatprep.subr.bf16.mxu0 0
  %385 = vmatpush1.bf16.msra.mxu0 0
  %386 = vmatprep.mubr.bf16.mxu0 0
  %387 = vmatmul.mubr.bf16.gmra.mrb[0].mxu0 %v352
  %v388 = vpop.f32.mrb[0].mxu0
  %v389 = vadd.f32 %v325, %v388
  %v390 = vpop.f32.mrb[0].mxu0
  %v391 = vpop.f32.mrb[0].mxu0
  %v392 = vadd.f32 %v325, %v391
  %v393 = vpop.f32.mrb[0].mxu0
  %394 = vdwg.mxu0
  %v395 = vmax.f32 %v389, 0.0
  %v396 = vmax.f32 %v392, 0.0
  %v398 = vlaneseq
  %v399 = vshrl.u32 %v398, 7
  %v400 = vsub.s32 0, %v399
  %v401 = vrot.slane %v77, %v400
  %v403 = vmul.f32 %v395, %v401
  %v404 = vmul.f32 %v396, %v401
  %v405 = vpack.c.bf16 %v404, %v403
  %v408 = vunpack.c.l.b16 %v78
  %v409 = vunpack.c.l.b16 %v79
  %v410 = vpack.c.b16 %v409, %v408
  %vm412 = vcmask 130048
  %v414 = vsel %vm412, %v405, 0
  %416 = vmatprep.subr.bf16.mxu0 0
  %417 = vmatpush1.bf16.msra.mxu0 %v410
  %418 = vmatprep.subr.bf16.mxu0 0
  %419 = vmatpush1.bf16.msra.mxu0 0
  %420 = vmatprep.subr.bf16.mxu0 0
  %421 = vmatpush1.bf16.msra.mxu0 0
  %422 = vmatprep.subr.bf16.mxu0 0
  %423 = vmatpush1.bf16.msra.mxu0 0
  %424 = vmatprep.subr.bf16.mxu0 0
  %425 = vmatpush1.bf16.msra.mxu0 0
  %426 = vmatprep.subr.bf16.mxu0 0
  %427 = vmatpush1.bf16.msra.mxu0 0
  %428 = vmatprep.subr.bf16.mxu0 0
  %429 = vmatpush1.bf16.msra.mxu0 0
  %430 = vmatprep.subr.bf16.mxu0 0
  %431 = vmatpush1.bf16.msra.mxu0 0
  %432 = vmatprep.subr.bf16.mxu0 0
  %433 = vmatpush1.bf16.msra.mxu0 0
  %434 = vmatprep.subr.bf16.mxu0 0
  %435 = vmatpush1.bf16.msra.mxu0 0
  %436 = vmatprep.subr.bf16.mxu0 0
  %437 = vmatpush1.bf16.msra.mxu0 0
  %438 = vmatprep.subr.bf16.mxu0 0
  %439 = vmatpush1.bf16.msra.mxu0 0
  %440 = vmatprep.subr.bf16.mxu0 0
  %441 = vmatpush1.bf16.msra.mxu0 0
  %442 = vmatprep.subr.bf16.mxu0 0
  %443 = vmatpush1.bf16.msra.mxu0 0
  %444 = vmatprep.subr.bf16.mxu0 0
  %445 = vmatpush1.bf16.msra.mxu0 0
  %446 = vmatprep.subr.bf16.mxu0 0
  %447 = vmatpush1.bf16.msra.mxu0 0
  %448 = vmatprep.mubr.bf16.mxu0 0
  %449 = vmatmul.mubr.bf16.gmra.mrb[0].mxu0 %v414
  %v450 = vpop.f32.mrb[0].mxu0
  %v451 = vadd.f32 0.0, %v450
  %v452 = vpop.f32.mrb[0].mxu0
  %v453 = vpop.f32.mrb[0].mxu0
  %v454 = vadd.f32 0.0, %v453
  %v455 = vpop.f32.mrb[0].mxu0
  %456 = vdwg.mxu0
  %v457 = vmul.f32 %v451, 0.5
  %v458 = vmul.f32 %v454, 0.5
  %v459 = vmul.f32 %v451, 0.70710677
  %v460 = vmul.f32 %v454, 0.70710677
  %v461 = verf.f32.pop %v459
  %v462 = verf.f32.pop %v460
  %v463 = vadd.f32 %v461, 1.0
  %v464 = vadd.f32 %v462, 1.0
  %v465 = vmul.f32 %v457, %v463
  %v466 = vmul.f32 %v458, %v464
  %467 = vst.msk [vmem:[%s11] sm:$0xff] %vm412, %v465
  %468 = vst.msk [vmem:[%s11 + $0x8] sm:$0xff] %vm412, %v466
  // Predicated region
  $region46: #{forward.3} parent=0 // pred_check
    _
  $region47: #{forward.3} parent=0 // pred_check_branch
    %470 = sbr.rel (0) target = $region49
  $region48: #{forward.3} parent=0 // pred_region
    _
  $region49: #{forward.3} parent=0 // pred_fallthru
    _
  // Predicated region
  $region50: #{forward.3} parent=0 // pred_check
    _
  $region51: #{forward.3} parent=0 // pred_check_branch
    %472 = sbr.rel (0) target = $region53
  $region52: #{forward.3} parent=0 // pred_region
    _
  $region53: #{forward.3} parent=0 // pred_fallthru
    _

// kernel: forward.5
$region0: #{forward.5}
  #allocation0 [shape = 'u32[]', space=smem, size = 0x4, offset = 0x4, fixed_abs, tag = 'smem constant byte address 0x4 - core index']
  #allocation1 [shape = 'u32[144,128]{1,0:T(1,128)}', space=vmem, size = 0x12000, scoped, tag = 'internal scratch']
  %s0 = inlined_call_operand.vmem [shape: f32[32,4], index: 0, kind: input, shape index: {}]
  %s1 = inlined_call_operand.vmem [shape: f32[32,4], index: 1, kind: input, shape index: {}]
  %s2 = inlined_call_operand.vmem [shape: f32[32,4], index: 2, kind: input, shape index: {}]
  %s3 = inlined_call_operand.vmem [shape: f32[4,8,32], index: 3, kind: input, shape index: {}]
  %s4 = inlined_call_operand.vmem [shape: f32[4,4,16], index: 4, kind: input, shape index: {}]
  %s5 = inlined_call_operand.vmem [shape: f32[1,16], index: 5, kind: input, shape index: {}]
  %s6 = inlined_call_operand.vmem [shape: bf16[16,128], index: 6, kind: input, shape index: {}]
  %s7 = inlined_call_operand.vmem [shape: f32[1,128], index: 7, kind: input, shape index: {}]
  %s8 = inlined_call_operand.hbm [shape: f32[8,128], index: 8, kind: output, shape index: {}]
  %s9 = sld [smem:[#allocation0]]
  $region42: #{forward.5} parent=0
    _
  %s11 = ssub.s32 1, %s9
  %s12 = scalar_select 0, %s11, %s9
  $region1: #{forward.5} parent=0
    #allocation2 [shape = 'u8[4096]{0}', space=vmem, size = 0x1000, scoped, tag = 'output window, operand 0, single buffered']
    #allocation3 [shape = 's32[1]{0}', space=sflag, size = 0x4, scoped, tag = 'scoped memory for forward.5']
    %13 = vsyncpa [#allocation3], 0
    // Predicated region
    $region2: #{forward.5} parent=1 // pred_check
      _
    $region3: #{forward.5} parent=1 // pred_check_branch
      %15 = sbr.rel (0) target = $region5
    $region4: #{forward.5} parent=1 // pred_region
      _
    $region5: #{forward.5} parent=1 // pred_fallthru
      _
    // Predicated region
    $region6: #{forward.5} parent=1 // pred_check
      _
    $region7: #{forward.5} parent=1 // pred_check_branch
      %17 = sbr.rel (0) target = $region9
    $region8: #{forward.5} parent=1 // pred_region
      _
    $region9: #{forward.5} parent=1 // pred_fallthru
      _
    // Predicated region
    $region10: #{forward.5} parent=1 // pred_check
      _
    $region11: #{forward.5} parent=1 // pred_check_branch
      %19 = sbr.rel (0) target = $region13
    $region12: #{forward.5} parent=1 // pred_region
      _
    $region13: #{forward.5} parent=1 // pred_fallthru
      _
    // Predicated region
    $region14: #{forward.5} parent=1 // pred_check
      _
    $region15: #{forward.5} parent=1 // pred_check_branch
      %21 = sbr.rel (0) target = $region17
    $region16: #{forward.5} parent=1 // pred_region
      _
    $region17: #{forward.5} parent=1 // pred_fallthru
      _
    // Predicated region
    $region18: #{forward.5} parent=1 // pred_check
      _
    $region19: #{forward.5} parent=1 // pred_check_branch
      %23 = sbr.rel (0) target = $region21
    $region20: #{forward.5} parent=1 // pred_region
      _
    $region21: #{forward.5} parent=1 // pred_fallthru
      _
    // Predicated region
    $region22: #{forward.5} parent=1 // pred_check
      _
    $region23: #{forward.5} parent=1 // pred_check_branch
      %25 = sbr.rel (0) target = $region25
    $region24: #{forward.5} parent=1 // pred_region
      _
    $region25: #{forward.5} parent=1 // pred_fallthru
      _
    // Predicated region
    $region26: #{forward.5} parent=1 // pred_check
      _
    $region27: #{forward.5} parent=1 // pred_check_branch
      %27 = sbr.rel (0) target = $region29
    $region28: #{forward.5} parent=1 // pred_region
      _
    $region29: #{forward.5} parent=1 // pred_fallthru
      _
    // Predicated region
    $region30: #{forward.5} parent=1 // pred_check
      _
    $region31: #{forward.5} parent=1 // pred_check_branch
      %29 = sbr.rel (0) target = $region33
    $region32: #{forward.5} parent=1 // pred_region
      _
    $region33: #{forward.5} parent=1 // pred_fallthru
      _
    %v31 = vld [vmem:[%s0] sm:$0xff]
    %v32 = vld [vmem:[%s0 + $0x8] sm:$0xff]
    %v33 = vld [vmem:[%s0 + $0x10] sm:$0xff]
    %v34 = vld [vmem:[%s0 + $0x18] sm:$0xff]
    %v35 = vpack.c.bf16 %v32, %v31
    %v36 = vpack.c.bf16 %v34, %v33
    %v37 = vld [vmem:[%s1] sm:$0xff]
    %v38 = vld [vmem:[%s1 + $0x8] sm:$0xff]
    %v39 = vld [vmem:[%s1 + $0x10] sm:$0xff]
    %v40 = vld [vmem:[%s1 + $0x18] sm:$0xff]
    %v41 = vpack.c.bf16 %v38, %v37
    %v42 = vpack.c.bf16 %v40, %v39
    %v43 = vld [vmem:[%s2] sm:$0xff]
    %v44 = vld [vmem:[%s2 + $0x8] sm:$0xff]
    %v45 = vld [vmem:[%s2 + $0x10] sm:$0xff]
    %v46 = vld [vmem:[%s2 + $0x18] sm:$0xff]
    %v47 = vpack.c.bf16 %v44, %v43
    %v48 = vpack.c.bf16 %v46, %v45
    %vm49 = vcmask 31744
    %v51 = vsel %vm49, %v35, 0
    %v54 = vsel %vm49, %v36, 0
    %v57 = vsel %vm49, %v41, 0
    %v60 = vsel %vm49, %v42, 0
    %62 = vmatprep.subr.bf16.mxu0 0
    %63 = vmatpush1.bf16.xpose.msra.mxu0 %v57
    %64 = vmatprep.subr.bf16.mxu0 0
    %65 = vmatpush1.bf16.xpose.msra.mxu0 %v60
    %66 = vmatprep.subr.bf16.mxu0 0
    %67 = vmatpush1.bf16.xpose.msra.mxu0 0
    %68 = vmatprep.subr.bf16.mxu0 0
    %69 = vmatpush1.bf16.xpose.msra.mxu0 0
    %70 = vmatprep.subr.bf16.mxu0 0
    %71 = vmatpush1.bf16.xpose.msra.mxu0 0
    %72 = vmatprep.subr.bf16.mxu0 0
    %73 = vmatpush1.bf16.xpose.msra.mxu0 0
    %74 = vmatprep.subr.bf16.mxu0 0
    %75 = vmatpush1.bf16.xpose.msra.mxu0 0
    %76 = vmatprep.subr.bf16.mxu0 0
    %77 = vmatpush1.bf16.xpose.msra.mxu0 0
    %78 = vmatprep.subr.bf16.mxu0 0
    %79 = vmatpush1.bf16.xpose.msra.mxu0 0
    %80 = vmatprep.subr.bf16.mxu0 0
    %81 = vmatpush1.bf16.xpose.msra.mxu0 0
    %82 = vmatprep.subr.bf16.mxu0 0
    %83 = vmatpush1.bf16.xpose.msra.mxu0 0
    %84 = vmatprep.subr.bf16.mxu0 0
    %85 = vmatpush1.bf16.xpose.msra.mxu0 0
    %86 = vmatprep.subr.bf16.mxu0 0
    %87 = vmatpush1.bf16.xpose.msra.mxu0 0
    %88 = vmatprep.subr.bf16.mxu0 0
    %89 = vmatpush1.bf16.xpose.msra.mxu0 0
    %90 = vmatprep.subr.bf16.mxu0 0
    %91 = vmatpush1.bf16.xpose.msra.mxu0 0
    %92 = vmatprep.subr.bf16.mxu0 0
    %93 = vmatpush1.bf16.xpose.msra.mxu0 0
    %94 = vmatprep.mubr.bf16.mxu0 0
    %95 = vmatmul.mubr.bf16.gmra.mrb[0].mxu0 %v51
    %v96 = vpop.f32.mrb[0].mxu0
    %v97 = vadd.f32 0.0, %v96
    %v98 = vpop.f32.mrb[0].mxu0
    %v99 = vpop.f32.mrb[0].mxu0
    %v100 = vadd.f32 0.0, %v99
    %v101 = vpop.f32.mrb[0].mxu0
    %102 = vmatprep.mubr.bf16.mxu0 0
    %103 = vmatmul.mubr.bf16.gmra.mrb[0].mxu0 %v54
    %v104 = vpop.f32.mrb[0].mxu0
    %v105 = vadd.f32 0.0, %v104
    %v106 = vpop.f32.mrb[0].mxu0
    %v107 = vpop.f32.mrb[0].mxu0
    %v108 = vadd.f32 0.0, %v107
    %v109 = vpop.f32.mrb[0].mxu0
    %110 = vdwg.mxu0
    %vm111 = vcmask 261120
    %v112 = vsel %vm111, %v97, -inf
    %113 = vmax.xlane.f32.xlu0 %v112
    %v114 = vpop.xlane.xlu0 %113
    %v115 = vsel %vm111, %v100, -inf
    %116 = vmax.xlane.f32.xlu0 %v115
    %v117 = vpop.xlane.xlu0 %116
    %v118 = vsel %vm111, %v105, -inf
    %119 = vmax.xlane.f32.xlu0 %v118
    %v120 = vpop.xlane.xlu0 %119
    %v121 = vsel %vm111, %v108, -inf
    %122 = vmax.xlane.f32.xlu0 %v121
    %v123 = vpop.xlane.xlu0 %122
    %v124 = vsub.f32 %v97, %v114
    %v125 = vsub.f32 %v100, %v117
    %v126 = vsub.f32 %v105, %v120
    %v127 = vsub.f32 %v108, %v123
    %v128 = vmul.f32 %v124, 1.442695
    %v129 = vpow.pop %v128
    %v130 = vmul.f32 %v125, 1.442695
    %v131 = vpow.pop %v130
    %v132 = vmul.f32 %v126, 1.442695
    %v133 = vpow.pop %v132
    %v134 = vmul.f32 %v127, 1.442695
    %v135 = vpow.pop %v134
    %v136 = vsel %vm111, %v129, 0.0
    %137 = vadd.xlane.f32.xlu0 %v136
    %v138 = vpop.xlane.xlu0 %137
    %v139 = vsel %vm111, %v131, 0.0
    %140 = vadd.xlane.f32.xlu0 %v139
    %v141 = vpop.xlane.xlu0 %140
    %v142 = vsel %vm111, %v133, 0.0
    %143 = vadd.xlane.f32.xlu0 %v142
    %v144 = vpop.xlane.xlu0 %143
    %v145 = vsel %vm111, %v135, 0.0
    %146 = vadd.xlane.f32.xlu0 %v145
    %v147 = vpop.xlane.xlu0 %146
    %v148 = vrcp.pop %v138
    %v149 = vrcp.pop %v141
    %v150 = vrcp.pop %v144
    %v151 = vrcp.pop %v147
    %v152 = vmul.f32 %v129, %v148
    %v153 = vmul.f32 %v131, %v149
    %v154 = vmul.f32 %v133, %v150
    %v155 = vmul.f32 %v135, %v151
    %v156 = vpack.c.bf16 %v153, %v152
    %v157 = vpack.c.bf16 %v155, %v154
    %v159 = vsel %vm111, %v156, 0
    %v162 = vsel %vm111, %v157, 0
    %164 = vmatprep.subr.bf16.mxu0 0
    %165 = vmatpush1.bf16.msra.mxu0 %v47
    %166 = vmatprep.subr.bf16.mxu0 0
    %167 = vmatpush1.bf16.msra.mxu0 %v48
    %168 = vmatprep.subr.bf16.mxu0 0
    %169 = vmatpush1.bf16.msra.mxu0 0
    %170 = vmatprep.subr.bf16.mxu0 0
    %171 = vmatpush1.bf16.msra.mxu0 0
    %172 = vmatprep.subr.bf16.mxu0 0
    %173 = vmatpush1.bf16.msra.mxu0 0
    %174 = vmatprep.subr.bf16.mxu0 0
    %175 = vmatpush1.bf16.msra.mxu0 0
    %176 = vmatprep.subr.bf16.mxu0 0
    %177 = vmatpush1.bf16.msra.mxu0 0
    %178 = vmatprep.subr.bf16.mxu0 0
    %179 = vmatpush1.bf16.msra.mxu0 0
    %180 = vmatprep.subr.bf16.mxu0 0
    %181 = vmatpush1.bf16.msra.mxu0 0
    %182 = vmatprep.subr.bf16.mxu0 0
    %183 = vmatpush1.bf16.msra.mxu0 0
    %184 = vmatprep.subr.bf16.mxu0 0
    %185 = vmatpush1.bf16.msra.mxu0 0
    %186 = vmatprep.subr.bf16.mxu0 0
    %187 = vmatpush1.bf16.msra.mxu0 0
    %188 = vmatprep.subr.bf16.mxu0 0
    %189 = vmatpush1.bf16.msra.mxu0 0
    %190 = vmatprep.subr.bf16.mxu0 0
    %191 = vmatpush1.bf16.msra.mxu0 0
    %192 = vmatprep.subr.bf16.mxu0 0
    %193 = vmatpush1.bf16.msra.mxu0 0
    %194 = vmatprep.subr.bf16.mxu0 0
    %195 = vmatpush1.bf16.msra.mxu0 0
    %196 = vmatprep.mubr.bf16.mxu0 0
    %197 = vmatmul.mubr.bf16.gmra.mrb[0].mxu0 %v159
    %v198 = vpop.f32.mrb[0].mxu0
    %v199 = vadd.f32 0.0, %v198
    %v200 = vpop.f32.mrb[0].mxu0
    %v201 = vpop.f32.mrb[0].mxu0
    %v202 = vadd.f32 0.0, %v201
    %v203 = vpop.f32.mrb[0].mxu0
    %204 = vmatprep.mubr.bf16.mxu0 0
    %205 = vmatmul.mubr.bf16.gmra.mrb[0].mxu0 %v162
    %v206 = vpop.f32.mrb[0].mxu0
    %v207 = vadd.f32 0.0, %v206
    %v208 = vpop.f32.mrb[0].mxu0
    %v209 = vpop.f32.mrb[0].mxu0
    %v210 = vadd.f32 0.0, %v209
    %v211 = vpop.f32.mrb[0].mxu0
    %212 = vdwg.mxu0
    %v213 = vld [vmem:[%s5] sm:$0x1]
    %v214 = vld [vmem:[%s3] sm:$0xff]
    %v216 = vsel %vm111, %v214, 0
    %218 = vmatprep.subr.mxu0 0.0
    %219 = vmatpush1.msra.mxu0 %v199
    %220 = vmatprep.subr.mxu0 0.0
    %221 = vmatpush1.msra.mxu0 %v202
    %222 = vmatprep.subr.mxu0 0.0
    %223 = vmatpush1.msra.mxu0 %v207
    %224 = vmatprep.subr.mxu0 0.0
    %225 = vmatpush1.msra.mxu0 %v210
    %226 = vmatprep.subr.mxu0 0.0
    %227 = vmatpush1.msra.mxu0 0.0
    %228 = vmatprep.subr.mxu0 0.0
    %229 = vmatpush1.msra.mxu0 0.0
    %230 = vmatprep.subr.mxu0 0.0
    %231 = vmatpush1.msra.mxu0 0.0
    %232 = vmatprep.subr.mxu0 0.0
    %233 = vmatpush1.msra.mxu0 0.0
    %234 = vmatprep.subr.mxu0 0.0
    %235 = vmatpush1.msra.mxu0 0.0
    %236 = vmatprep.subr.mxu0 0.0
    %237 = vmatpush1.msra.mxu0 0.0
    %238 = vmatprep.subr.mxu0 0.0
    %239 = vmatpush1.msra.mxu0 0.0
    %240 = vmatprep.subr.mxu0 0.0
    %241 = vmatpush1.msra.mxu0 0.0
    %242 = vmatprep.subr.mxu0 0.0
    %243 = vmatpush1.msra.mxu0 0.0
    %244 = vmatprep.subr.mxu0 0.0
    %245 = vmatpush1.msra.mxu0 0.0
    %246 = vmatprep.subr.mxu0 0.0
    %247 = vmatpush1.msra.mxu0 0.0
    %248 = vmatprep.subr.mxu0 0.0
    %249 = vmatpush1.msra.mxu0 0.0
    %250 = vmatprep.subr.mxu0 0.0
    %251 = vmatpush1.msra.mxu0 0.0
    %252 = vmatprep.subr.mxu0 0.0
    %253 = vmatpush1.msra.mxu0 0.0
    %254 = vmatprep.subr.mxu0 0.0
    %255 = vmatpush1.msra.mxu0 0.0
    %256 = vmatprep.subr.mxu0 0.0
    %257 = vmatpush1.msra.mxu0 0.0
    %258 = vmatprep.subr.mxu0 0.0
    %259 = vmatpush1.msra.mxu0 0.0
    %260 = vmatprep.subr.mxu0 0.0
    %261 = vmatpush1.msra.mxu0 0.0
    %262 = vmatprep.subr.mxu0 0.0
    %263 = vmatpush1.msra.mxu0 0.0
    %264 = vmatprep.subr.mxu0 0.0
    %265 = vmatpush1.msra.mxu0 0.0
    %266 = vmatprep.subr.mxu0 0.0
    %267 = vmatpush1.msra.mxu0 0.0
    %268 = vmatprep.subr.mxu0 0.0
    %269 = vmatpush1.msra.mxu0 0.0
    %270 = vmatprep.subr.mxu0 0.0
    %271 = vmatpush1.msra.mxu0 0.0
    %272 = vmatprep.subr.mxu0 0.0
    %273 = vmatpush1.msra.mxu0 0.0
    %274 = vmatprep.subr.mxu0 0.0
    %275 = vmatpush1.msra.mxu0 0.0
    %276 = vmatprep.subr.mxu0 0.0
    %277 = vmatpush1.msra.mxu0 0.0
    %278 = vmatprep.subr.mxu0 0.0
    %279 = vmatpush1.msra.mxu0 0.0
    %280 = vmatprep.subr.mxu0 0.0
    %281 = vmatpush1.msra.mxu0 0.0
    %282 = vmatprep.mubr.f32.mxu0 0.0
    %283 = vmatmul.mubr.f32.gmra.mrb[0].mxu0 %v216
    %v284 = vpop.f32.mrb[0].mxu0
    %v285 = vadd.f32 0.0, %v284
    %v286 = vpop.f32.mrb[0].mxu0
    %287 = vdwg.mxu0
    %v288 = vld [vmem:[%s4] sm:$0xf]
    %v290 = vsel %vm49, %v285, 0
    %vm292 = vcmask 1043456
    %v294 = vsel %vm292, %v288, 0
    %296 = vmatprep.subr.mxu0 0.0
    %297 = vmatpush1.msra.mxu0 %v294
    %298 = vmatprep.subr.mxu0 0.0
    %299 = vmatpush1.msra.mxu0 0.0
    %300 = vmatprep.subr.mxu0 0.0
    %301 = vmatpush1.msra.mxu0 0.0
    %302 = vmatprep.subr.mxu0 0.0
    %303 = vmatpush1.msra.mxu0 0.0
    %304 = vmatprep.subr.mxu0 0.0
    %305 = vmatpush1.msra.mxu0 0.0
    %306 = vmatprep.subr.mxu0 0.0
    %307 = vmatpush1.msra.mxu0 0.0
    %308 = vmatprep.subr.mxu0 0.0
    %309 = vmatpush1.msra.mxu0 0.0
    %310 = vmatprep.subr.mxu0 0.0
    %311 = vmatpush1.msra.mxu0 0.0
    %312 = vmatprep.subr.mxu0 0.0
    %313 = vmatpush1.msra.mxu0 0.0
    %314 = vmatprep.subr.mxu0 0.0
    %315 = vmatpush1.msra.mxu0 0.0
    %316 = vmatprep.subr.mxu0 0.0
    %317 = vmatpush1.msra.mxu0 0.0
    %318 = vmatprep.subr.mxu0 0.0
    %319 = vmatpush1.msra.mxu0 0.0
    %320 = vmatprep.subr.mxu0 0.0
    %321 = vmatpush1.msra.mxu0 0.0
    %322 = vmatprep.subr.mxu0 0.0
    %323 = vmatpush1.msra.mxu0 0.0
    %324 = vmatprep.subr.mxu0 0.0
    %325 = vmatpush1.msra.mxu0 0.0
    %326 = vmatprep.subr.mxu0 0.0
    %327 = vmatpush1.msra.mxu0 0.0
    %328 = vmatprep.subr.mxu0 0.0
    %329 = vmatpush1.msra.mxu0 0.0
    %330 = vmatprep.subr.mxu0 0.0
    %331 = vmatpush1.msra.mxu0 0.0
    %332 = vmatprep.subr.mxu0 0.0
    %333 = vmatpush1.msra.mxu0 0.0
    %334 = vmatprep.subr.mxu0 0.0
    %335 = vmatpush1.msra.mxu0 0.0
    %336 = vmatprep.subr.mxu0 0.0
    %337 = vmatpush1.msra.mxu0 0.0
    %338 = vmatprep.subr.mxu0 0.0
    %339 = vmatpush1.msra.mxu0 0.0
    %340 = vmatprep.subr.mxu0 0.0
    %341 = vmatpush1.msra.mxu0 0.0
    %342 = vmatprep.subr.mxu0 0.0
    %343 = vmatpush1.msra.mxu0 0.0
    %344 = vmatprep.subr.mxu0 0.0
    %345 = vmatpush1.msra.mxu0 0.0
    %346 = vmatprep.subr.mxu0 0.0
    %347 = vmatpush1.msra.mxu0 0.0
    %348 = vmatprep.subr.mxu0 0.0
    %349 = vmatpush1.msra.mxu0 0.0
    %350 = vmatprep.subr.mxu0 0.0
    %351 = vmatpush1.msra.mxu0 0.0
    %352 = vmatprep.subr.mxu0 0.0
    %353 = vmatpush1.msra.mxu0 0.0
    %354 = vmatprep.subr.mxu0 0.0
    %355 = vmatpush1.msra.mxu0 0.0
    %356 = vmatprep.subr.mxu0 0.0
    %357 = vmatpush1.msra.mxu0 0.0
    %358 = vmatprep.subr.mxu0 0.0
    %359 = vmatpush1.msra.mxu0 0.0
    %360 = vmatprep.mubr.f32.mxu0 0.0
    %361 = vmatmul.mubr.f32.gmra.mrb[0].mxu0 %v290
    %v362 = vpop.f32.mrb[0].mxu0
    %v363 = vadd.f32 0.0, %v362
    %v364 = vpop.f32.mrb[0].mxu0
    %365 = vdwg.mxu0
    %v367 = vlaneseq
    %v368 = vshrl.u32 %v367, 7
    %v369 = vsub.s32 0, %v368
    %v370 = vrot.slane %v213, %v369
    %v372 = vadd.f32 %v370, %v363
    %s373 = scalar_lea.vmem %s3, 8
    %v374 = vld [vmem:[%s373] sm:$0xff]
    %v376 = vsel %vm111, %v374, 0
    %378 = vmatprep.subr.mxu0 0.0
    %379 = vmatpush1.msra.mxu0 %v199
    %380 = vmatprep.subr.mxu0 0.0
    %381 = vmatpush1.msra.mxu0 %v202
    %382 = vmatprep.subr.mxu0 0.0
    %383 = vmatpush1.msra.mxu0 %v207
    %384 = vmatprep.subr.mxu0 0.0
    %385 = vmatpush1.msra.mxu0 %v210
    %386 = vmatprep.subr.mxu0 0.0
    %387 = vmatpush1.msra.mxu0 0.0
    %388 = vmatprep.subr.mxu0 0.0
    %389 = vmatpush1.msra.mxu0 0.0
    %390 = vmatprep.subr.mxu0 0.0
    %391 = vmatpush1.msra.mxu0 0.0
    %392 = vmatprep.subr.mxu0 0.0
    %393 = vmatpush1.msra.mxu0 0.0
    %394 = vmatprep.subr.mxu0 0.0
    %395 = vmatpush1.msra.mxu0 0.0
    %396 = vmatprep.subr.mxu0 0.0
    %397 = vmatpush1.msra.mxu0 0.0
    %398 = vmatprep.subr.mxu0 0.0
    %399 = vmatpush1.msra.mxu0 0.0
    %400 = vmatprep.subr.mxu0 0.0
    %401 = vmatpush1.msra.mxu0 0.0
    %402 = vmatprep.subr.mxu0 0.0
    %403 = vmatpush1.msra.mxu0 0.0
    %404 = vmatprep.subr.mxu0 0.0
    %405 = vmatpush1.msra.mxu0 0.0
    %406 = vmatprep.subr.mxu0 0.0
    %407 = vmatpush1.msra.mxu0 0.0
    %408 = vmatprep.subr.mxu0 0.0
    %409 = vmatpush1.msra.mxu0 0.0
    %410 = vmatprep.subr.mxu0 0.0
    %411 = vmatpush1.msra.mxu0 0.0
    %412 = vmatprep.subr.mxu0 0.0
    %413 = vmatpush1.msra.mxu0 0.0
    %414 = vmatprep.subr.mxu0 0.0
    %415 = vmatpush1.msra.mxu0 0.0
    %416 = vmatprep.subr.mxu0 0.0
    %417 = vmatpush1.msra.mxu0 0.0
    %418 = vmatprep.subr.mxu0 0.0
    %419 = vmatpush1.msra.mxu0 0.0
    %420 = vmatprep.subr.mxu0 0.0
    %421 = vmatpush1.msra.mxu0 0.0
    %422 = vmatprep.subr.mxu0 0.0
    %423 = vmatpush1.msra.mxu0 0.0
    %424 = vmatprep.subr.mxu0 0.0
    %425 = vmatpush1.msra.mxu0 0.0
    %426 = vmatprep.subr.mxu0 0.0
    %427 = vmatpush1.msra.mxu0 0.0
    %428 = vmatprep.subr.mxu0 0.0
    %429 = vmatpush1.msra.mxu0 0.0
    %430 = vmatprep.subr.mxu0 0.0
    %431 = vmatpush1.msra.mxu0 0.0
    %432 = vmatprep.subr.mxu0 0.0
    %433 = vmatpush1.msra.mxu0 0.0
    %434 = vmatprep.subr.mxu0 0.0
    %435 = vmatpush1.msra.mxu0 0.0
    %436 = vmatprep.subr.mxu0 0.0
    %437 = vmatpush1.msra.mxu0 0.0
    %438 = vmatprep.subr.mxu0 0.0
    %439 = vmatpush1.msra.mxu0 0.0
    %440 = vmatprep.subr.mxu0 0.0
    %441 = vmatpush1.msra.mxu0 0.0
    %442 = vmatprep.mubr.f32.mxu0 0.0
    %443 = vmatmul.mubr.f32.gmra.mrb[0].mxu0 %v376
    %v444 = vpop.f32.mrb[0].mxu0
    %v445 = vadd.f32 0.0, %v444
    %v446 = vpop.f32.mrb[0].mxu0
    %447 = vdwg.mxu0
    %s448 = scalar_lea.vmem %s4, 4
    %v449 = vld [vmem:[%s448] sm:$0xf]
    %v451 = vsel %vm49, %v445, 0
    %v454 = vsel %vm292, %v449, 0
    %456 = vmatprep.subr.mxu0 0.0
    %457 = vmatpush1.msra.mxu0 %v454
    %458 = vmatprep.subr.mxu0 0.0
    %459 = vmatpush1.msra.mxu0 0.0
    %460 = vmatprep.subr.mxu0 0.0
    %461 = vmatpush1.msra.mxu0 0.0
    %462 = vmatprep.subr.mxu0 0.0
    %463 = vmatpush1.msra.mxu0 0.0
    %464 = vmatprep.subr.mxu0 0.0
    %465 = vmatpush1.msra.mxu0 0.0
    %466 = vmatprep.subr.mxu0 0.0
    %467 = vmatpush1.msra.mxu0 0.0
    %468 = vmatprep.subr.mxu0 0.0
    %469 = vmatpush1.msra.mxu0 0.0
    %470 = vmatprep.subr.mxu0 0.0
    %471 = vmatpush1.msra.mxu0 0.0
    %472 = vmatprep.subr.mxu0 0.0
    %473 = vmatpush1.msra.mxu0 0.0
    %474 = vmatprep.subr.mxu0 0.0
    %475 = vmatpush1.msra.mxu0 0.0
    %476 = vmatprep.subr.mxu0 0.0
    %477 = vmatpush1.msra.mxu0 0.0
    %478 = vmatprep.subr.mxu0 0.0
    %479 = vmatpush1.msra.mxu0 0.0
    %480 = vmatprep.subr.mxu0 0.0
    %481 = vmatpush1.msra.mxu0 0.0
    %482 = vmatprep.subr.mxu0 0.0
    %483 = vmatpush1.msra.mxu0 0.0
    %484 = vmatprep.subr.mxu0 0.0
    %485 = vmatpush1.msra.mxu0 0.0
    %486 = vmatprep.subr.mxu0 0.0
    %487 = vmatpush1.msra.mxu0 0.0
    %488 = vmatprep.subr.mxu0 0.0
    %489 = vmatpush1.msra.mxu0 0.0
    %490 = vmatprep.subr.mxu0 0.0
    %491 = vmatpush1.msra.mxu0 0.0
    %492 = vmatprep.subr.mxu0 0.0
    %493 = vmatpush1.msra.mxu0 0.0
    %494 = vmatprep.subr.mxu0 0.0
    %495 = vmatpush1.msra.mxu0 0.0
    %496 = vmatprep.subr.mxu0 0.0
    %497 = vmatpush1.msra.mxu0 0.0
    %498 = vmatprep.subr.mxu0 0.0
    %499 = vmatpush1.msra.mxu0 0.0
    %500 = vmatprep.subr.mxu0 0.0
    %501 = vmatpush1.msra.mxu0 0.0
    %502 = vmatprep.subr.mxu0 0.0
    %503 = vmatpush1.msra.mxu0 0.0
    %504 = vmatprep.subr.mxu0 0.0
    %505 = vmatpush1.msra.mxu0 0.0
    %506 = vmatprep.subr.mxu0 0.0
    %507 = vmatpush1.msra.mxu0 0.0
    %508 = vmatprep.subr.mxu0 0.0
    %509 = vmatpush1.msra.mxu0 0.0
    %510 = vmatprep.subr.mxu0 0.0
    %511 = vmatpush1.msra.mxu0 0.0
    %512 = vmatprep.subr.mxu0 0.0
    %513 = vmatpush1.msra.mxu0 0.0
    %514 = vmatprep.subr.mxu0 0.0
    %515 = vmatpush1.msra.mxu0 0.0
    %516 = vmatprep.subr.mxu0 0.0
    %517 = vmatpush1.msra.mxu0 0.0
    %518 = vmatprep.subr.mxu0 0.0
    %519 = vmatpush1.msra.mxu0 0.0
    %520 = vmatprep.mubr.f32.mxu0 0.0
    %521 = vmatmul.mubr.f32.gmra.mrb[0].mxu0 %v451
    %v522 = vpop.f32.mrb[0].mxu0
    %v523 = vadd.f32 0.0, %v522
    %v524 = vpop.f32.mrb[0].mxu0
    %525 = vdwg.mxu0
    %v526 = vadd.f32 %v372, %v523
    %s527 = scalar_lea.vmem %s3, 16
    %v528 = vld [vmem:[%s527] sm:$0xff]
    %v530 = vsel %vm111, %v528, 0
    %532 = vmatprep.subr.mxu0 0.0
    %533 = vmatpush1.msra.mxu0 %v199
    %534 = vmatprep.subr.mxu0 0.0
    %535 = vmatpush1.msra.mxu0 %v202
    %536 = vmatprep.subr.mxu0 0.0
    %537 = vmatpush1.msra.mxu0 %v207
    %538 = vmatprep.subr.mxu0 0.0
    %539 = vmatpush1.msra.mxu0 %v210
    %540 = vmatprep.subr.mxu0 0.0
    %541 = vmatpush1.msra.mxu0 0.0
    %542 = vmatprep.subr.mxu0 0.0
    %543 = vmatpush1.msra.mxu0 0.0
    %544 = vmatprep.subr.mxu0 0.0
    %545 = vmatpush1.msra.mxu0 0.0
    %546 = vmatprep.subr.mxu0 0.0
    %547 = vmatpush1.msra.mxu0 0.0
    %548 = vmatprep.subr.mxu0 0.0
    %549 = vmatpush1.msra.mxu0 0.0
    %550 = vmatprep.subr.mxu0 0.0
    %551 = vmatpush1.msra.mxu0 0.0
    %552 = vmatprep.subr.mxu0 0.0
    %553 = vmatpush1.msra.mxu0 0.0
    %554 = vmatprep.subr.mxu0 0.0
    %555 = vmatpush1.msra.mxu0 0.0
    %556 = vmatprep.subr.mxu0 0.0
    %557 = vmatpush1.msra.mxu0 0.0
    %558 = vmatprep.subr.mxu0 0.0
    %559 = vmatpush1.msra.mxu0 0.0
    %560 = vmatprep.subr.mxu0 0.0
    %561 = vmatpush1.msra.mxu0 0.0
    %562 = vmatprep.subr.mxu0 0.0
    %563 = vmatpush1.msra.mxu0 0.0
    %564 = vmatprep.subr.mxu0 0.0
    %565 = vmatpush1.msra.mxu0 0.0
    %566 = vmatprep.subr.mxu0 0.0
    %567 = vmatpush1.msra.mxu0 0.0
    %568 = vmatprep.subr.mxu0 0.0
    %569 = vmatpush1.msra.mxu0 0.0
    %570 = vmatprep.subr.mxu0 0.0
    %571 = vmatpush1.msra.mxu0 0.0
    %572 = vmatprep.subr.mxu0 0.0
    %573 = vmatpush1.msra.mxu0 0.0
    %574 = vmatprep.subr.mxu0 0.0
    %575 = vmatpush1.msra.mxu0 0.0
    %576 = vmatprep.subr.mxu0 0.0
    %577 = vmatpush1.msra.mxu0 0.0
    %578 = vmatprep.subr.mxu0 0.0
    %579 = vmatpush1.msra.mxu0 0.0
    %580 = vmatprep.subr.mxu0 0.0
    %581 = vmatpush1.msra.mxu0 0.0
    %582 = vmatprep.subr.mxu0 0.0
    %583 = vmatpush1.msra.mxu0 0.0
    %584 = vmatprep.subr.mxu0 0.0
    %585 = vmatpush1.msra.mxu0 0.0
    %586 = vmatprep.subr.mxu0 0.0
    %587 = vmatpush1.msra.mxu0 0.0
    %588 = vmatprep.subr.mxu0 0.0
    %589 = vmatpush1.msra.mxu0 0.0
    %590 = vmatprep.subr.mxu0 0.0
    %591 = vmatpush1.msra.mxu0 0.0
    %592 = vmatprep.subr.mxu0 0.0
    %593 = vmatpush1.msra.mxu0 0.0
    %594 = vmatprep.subr.mxu0 0.0
    %595 = vmatpush1.msra.mxu0 0.0
    %596 = vmatprep.mubr.f32.mxu0 0.0
    %597 = vmatmul.mubr.f32.gmra.mrb[0].mxu0 %v530
    %v598 = vpop.f32.mrb[0].mxu0
    %v599 = vadd.f32 0.0, %v598
    %v600 = vpop.f32.mrb[0].mxu0
    %601 = vdwg.mxu0
    %s602 = scalar_lea.vmem %s4, 8
    %v603 = vld [vmem:[%s602] sm:$0xf]
    %v605 = vsel %vm49, %v599, 0
    %v608 = vsel %vm292, %v603, 0
    %610 = vmatprep.subr.mxu0 0.0
    %611 = vmatpush1.msra.mxu0 %v608
    %612 = vmatprep.subr.mxu0 0.0
    %613 = vmatpush1.msra.mxu0 0.0
    %614 = vmatprep.subr.mxu0 0.0
    %615 = vmatpush1.msra.mxu0 0.0
    %616 = vmatprep.subr.mxu0 0.0
    %617 = vmatpush1.msra.mxu0 0.0
    %618 = vmatprep.subr.mxu0 0.0
    %619 = vmatpush1.msra.mxu0 0.0
    %620 = vmatprep.subr.mxu0 0.0
    %621 = vmatpush1.msra.mxu0 0.0
    %622 = vmatprep.subr.mxu0 0.0
    %623 = vmatpush1.msra.mxu0 0.0
    %624 = vmatprep.subr.mxu0 0.0
    %625 = vmatpush1.msra.mxu0 0.0
    %626 = vmatprep.subr.mxu0 0.0
    %627 = vmatpush1.msra.mxu0 0.0
    %628 = vmatprep.subr.mxu0 0.0
    %629 = vmatpush1.msra.mxu0 0.0
    %630 = vmatprep.subr.mxu0 0.0
    %631 = vmatpush1.msra.mxu0 0.0
    %632 = vmatprep.subr.mxu0 0.0
    %633 = vmatpush1.msra.mxu0 0.0
    %634 = vmatprep.subr.mxu0 0.0
    %635 = vmatpush1.msra.mxu0 0.0
    %636 = vmatprep.subr.mxu0 0.0
    %637 = vmatpush1.msra.mxu0 0.0
    %638 = vmatprep.subr.mxu0 0.0
    %639 = vmatpush1.msra.mxu0 0.0
    %640 = vmatprep.subr.mxu0 0.0
    %641 = vmatpush1.msra.mxu0 0.0
    %642 = vmatprep.subr.mxu0 0.0
    %643 = vmatpush1.msra.mxu0 0.0
    %644 = vmatprep.subr.mxu0 0.0
    %645 = vmatpush1.msra.mxu0 0.0
    %646 = vmatprep.subr.mxu0 0.0
    %647 = vmatpush1.msra.mxu0 0.0
    %648 = vmatprep.subr.mxu0 0.0
    %649 = vmatpush1.msra.mxu0 0.0
    %650 = vmatprep.subr.mxu0 0.0
    %651 = vmatpush1.msra.mxu0 0.0
    %652 = vmatprep.subr.mxu0 0.0
    %653 = vmatpush1.msra.mxu0 0.0
    %654 = vmatprep.subr.mxu0 0.0
    %655 = vmatpush1.msra.mxu0 0.0
    %656 = vmatprep.subr.mxu0 0.0
    %657 = vmatpush1.msra.mxu0 0.0
    %658 = vmatprep.subr.mxu0 0.0
    %659 = vmatpush1.msra.mxu0 0.0
    %660 = vmatprep.subr.mxu0 0.0
    %661 = vmatpush1.msra.mxu0 0.0
    %662 = vmatprep.subr.mxu0 0.0
    %663 = vmatpush1.msra.mxu0 0.0
    %664 = vmatprep.subr.mxu0 0.0
    %665 = vmatpush1.msra.mxu0 0.0
    %666 = vmatprep.subr.mxu0 0.0
    %667 = vmatpush1.msra.mxu0 0.0
    %668 = vmatprep.subr.mxu0 0.0
    %669 = vmatpush1.msra.mxu0 0.0
    %670 = vmatprep.subr.mxu0 0.0
    %671 = vmatpush1.msra.mxu0 0.0
    %672 = vmatprep.subr.mxu0 0.0
    %673 = vmatpush1.msra.mxu0 0.0
    %674 = vmatprep.mubr.f32.mxu0 0.0
    %675 = vmatmul.mubr.f32.gmra.mrb[0].mxu0 %v605
    %v676 = vpop.f32.mrb[0].mxu0
    %v677 = vadd.f32 0.0, %v676
    %v678 = vpop.f32.mrb[0].mxu0
    %679 = vdwg.mxu0
    %v680 = vadd.f32 %v526, %v677
    %s681 = scalar_lea.vmem %s3, 24
    %v682 = vld [vmem:[%s681] sm:$0xff]
    %v684 = vsel %vm111, %v682, 0
    %686 = vmatprep.subr.mxu0 0.0
    %687 = vmatpush1.msra.mxu0 %v199
    %688 = vmatprep.subr.mxu0 0.0
    %689 = vmatpush1.msra.mxu0 %v202
    %690 = vmatprep.subr.mxu0 0.0
    %691 = vmatpush1.msra.mxu0 %v207
    %692 = vmatprep.subr.mxu0 0.0
    %693 = vmatpush1.msra.mxu0 %v210
    %694 = vmatprep.subr.mxu0 0.0
    %695 = vmatpush1.msra.mxu0 0.0
    %696 = vmatprep.subr.mxu0 0.0
    %697 = vmatpush1.msra.mxu0 0.0
    %698 = vmatprep.subr.mxu0 0.0
    %699 = vmatpush1.msra.mxu0 0.0
    %700 = vmatprep.subr.mxu0 0.0
    %701 = vmatpush1.msra.mxu0 0.0
    %702 = vmatprep.subr.mxu0 0.0
    %703 = vmatpush1.msra.mxu0 0.0
    %704 = vmatprep.subr.mxu0 0.0
    %705 = vmatpush1.msra.mxu0 0.0
    %706 = vmatprep.subr.mxu0 0.0
    %707 = vmatpush1.msra.mxu0 0.0
    %708 = vmatprep.subr.mxu0 0.0
    %709 = vmatpush1.msra.mxu0 0.0
    %710 = vmatprep.subr.mxu0 0.0
    %711 = vmatpush1.msra.mxu0 0.0
    %712 = vmatprep.subr.mxu0 0.0
    %713 = vmatpush1.msra.mxu0 0.0
    %714 = vmatprep.subr.mxu0 0.0
    %715 = vmatpush1.msra.mxu0 0.0
    %716 = vmatprep.subr.mxu0 0.0
    %717 = vmatpush1.msra.mxu0 0.0
    %718 = vmatprep.subr.mxu0 0.0
    %719 = vmatpush1.msra.mxu0 0.0
    %720 = vmatprep.subr.mxu0 0.0
    %721 = vmatpush1.msra.mxu0 0.0
    %722 = vmatprep.subr.mxu0 0.0
    %723 = vmatpush1.msra.mxu0 0.0
    %724 = vmatprep.subr.mxu0 0.0
    %725 = vmatpush1.msra.mxu0 0.0
    %726 = vmatprep.subr.mxu0 0.0
    %727 = vmatpush1.msra.mxu0 0.0
    %728 = vmatprep.subr.mxu0 0.0
    %729 = vmatpush1.msra.mxu0 0.0
    %730 = vmatprep.subr.mxu0 0.0
    %731 = vmatpush1.msra.mxu0 0.0
    %732 = vmatprep.subr.mxu0 0.0
    %733 = vmatpush1.msra.mxu0 0.0
    %734 = vmatprep.subr.mxu0 0.0
    %735 = vmatpush1.msra.mxu0 0.0
    %736 = vmatprep.subr.mxu0 0.0
    %737 = vmatpush1.msra.mxu0 0.0
    %738 = vmatprep.subr.mxu0 0.0
    %739 = vmatpush1.msra.mxu0 0.0
    %740 = vmatprep.subr.mxu0 0.0
    %741 = vmatpush1.msra.mxu0 0.0
    %742 = vmatprep.subr.mxu0 0.0
    %743 = vmatpush1.msra.mxu0 0.0
    %744 = vmatprep.subr.mxu0 0.0
    %745 = vmatpush1.msra.mxu0 0.0
    %746 = vmatprep.subr.mxu0 0.0
    %747 = vmatpush1.msra.mxu0 0.0
    %748 = vmatprep.subr.mxu0 0.0
    %749 = vmatpush1.msra.mxu0 0.0
    %750 = vmatprep.mubr.f32.mxu0 0.0
    %751 = vmatmul.mubr.f32.gmra.mrb[0].mxu0 %v684
    %v752 = vpop.f32.mrb[0].mxu0
    %v753 = vadd.f32 0.0, %v752
    %v754 = vpop.f32.mrb[0].mxu0
    %755 = vdwg.mxu0
    %s756 = scalar_lea.vmem %s4, 12
    %v757 = vld [vmem:[%s756] sm:$0xf]
    %v759 = vsel %vm49, %v753, 0
    %v762 = vsel %vm292, %v757, 0
    %764 = vmatprep.subr.mxu0 0.0
    %765 = vmatpush1.msra.mxu0 %v762
    %766 = vmatprep.subr.mxu0 0.0
    %767 = vmatpush1.msra.mxu0 0.0
    %768 = vmatprep.subr.mxu0 0.0
    %769 = vmatpush1.msra.mxu0 0.0
    %770 = vmatprep.subr.mxu0 0.0
    %771 = vmatpush1.msra.mxu0 0.0
    %772 = vmatprep.subr.mxu0 0.0
    %773 = vmatpush1.msra.mxu0 0.0
    %774 = vmatprep.subr.mxu0 0.0
    %775 = vmatpush1.msra.mxu0 0.0
    %776 = vmatprep.subr.mxu0 0.0
    %777 = vmatpush1.msra.mxu0 0.0
    %778 = vmatprep.subr.mxu0 0.0
    %779 = vmatpush1.msra.mxu0 0.0
    %780 = vmatprep.subr.mxu0 0.0
    %781 = vmatpush1.msra.mxu0 0.0
    %782 = vmatprep.subr.mxu0 0.0
    %783 = vmatpush1.msra.mxu0 0.0
    %784 = vmatprep.subr.mxu0 0.0
    %785 = vmatpush1.msra.mxu0 0.0
    %786 = vmatprep.subr.mxu0 0.0
    %787 = vmatpush1.msra.mxu0 0.0
    %788 = vmatprep.subr.mxu0 0.0
    %789 = vmatpush1.msra.mxu0 0.0
    %790 = vmatprep.subr.mxu0 0.0
    %791 = vmatpush1.msra.mxu0 0.0
    %792 = vmatprep.subr.mxu0 0.0
    %793 = vmatpush1.msra.mxu0 0.0
    %794 = vmatprep.subr.mxu0 0.0
    %795 = vmatpush1.msra.mxu0 0.0
    %796 = vmatprep.subr.mxu0 0.0
    %797 = vmatpush1.msra.mxu0 0.0
    %798 = vmatprep.subr.mxu0 0.0
    %799 = vmatpush1.msra.mxu0 0.0
    %800 = vmatprep.subr.mxu0 0.0
    %801 = vmatpush1.msra.mxu0 0.0
    %802 = vmatprep.subr.mxu0 0.0
    %803 = vmatpush1.msra.mxu0 0.0
    %804 = vmatprep.subr.mxu0 0.0
    %805 = vmatpush1.msra.mxu0 0.0
    %806 = vmatprep.subr.mxu0 0.0
    %807 = vmatpush1.msra.mxu0 0.0
    %808 = vmatprep.subr.mxu0 0.0
    %809 = vmatpush1.msra.mxu0 0.0
    %810 = vmatprep.subr.mxu0 0.0
    %811 = vmatpush1.msra.mxu0 0.0
    %812 = vmatprep.subr.mxu0 0.0
    %813 = vmatpush1.msra.mxu0 0.0
    %814 = vmatprep.subr.mxu0 0.0
    %815 = vmatpush1.msra.mxu0 0.0
    %816 = vmatprep.subr.mxu0 0.0
    %817 = vmatpush1.msra.mxu0 0.0
    %818 = vmatprep.subr.mxu0 0.0
    %819 = vmatpush1.msra.mxu0 0.0
    %820 = vmatprep.subr.mxu0 0.0
    %821 = vmatpush1.msra.mxu0 0.0
    %822 = vmatprep.subr.mxu0 0.0
    %823 = vmatpush1.msra.mxu0 0.0
    %824 = vmatprep.subr.mxu0 0.0
    %825 = vmatpush1.msra.mxu0 0.0
    %826 = vmatprep.subr.mxu0 0.0
    %827 = vmatpush1.msra.mxu0 0.0
    %828 = vmatprep.mubr.f32.mxu0 0.0
    %829 = vmatmul.mubr.f32.gmra.mrb[0].mxu0 %v759
    %v830 = vpop.f32.mrb[0].mxu0
    %v831 = vadd.f32 0.0, %v830
    %v832 = vpop.f32.mrb[0].mxu0
    %833 = vdwg.mxu0
    %v834 = vadd.f32 %v680, %v831
    %v835 = vpack.c.bf16 %v834, %v834
    %v836 = vld [vmem:[%s6] sm:$0xf]
    %v837 = vld [vmem:[%s6 + $0x4] sm:$0xf]
    %v838 = vld [vmem:[%s7] sm:$0x1]
    %v840 = vlaneseq
    %v841 = vshrl.u32 %v840, 7
    %v842 = vsub.s32 0, %v841
    %v843 = vrot.slane %v838, %v842
    %v847 = vunpack.c.l.b16 %v836
    %v848 = vunpack.c.l.b16 %v837
    %v849 = vpack.c.b16 %v848, %v847
    %vm851 = vcmask 130048
    %v853 = vsel %vm851, %v835, 0
    %855 = vmatprep.subr.bf16.mxu0 0
    %856 = vmatpush1.bf16.msra.mxu0 %v849
    %857 = vmatprep.subr.bf16.mxu0 0
    %858 = vmatpush1.bf16.msra.mxu0 0
    %859 = vmatprep.subr.bf16.mxu0 0
    %860 = vmatpush1.bf16.msra.mxu0 0
    %861 = vmatprep.subr.bf16.mxu0 0
    %862 = vmatpush1.bf16.msra.mxu0 0
    %863 = vmatprep.subr.bf16.mxu0 0
    %864 = vmatpush1.bf16.msra.mxu0 0
    %865 = vmatprep.subr.bf16.mxu0 0
    %866 = vmatpush1.bf16.msra.mxu0 0
    %867 = vmatprep.subr.bf16.mxu0 0
    %868 = vmatpush1.bf16.msra.mxu0 0
    %869 = vmatprep.subr.bf16.mxu0 0
    %870 = vmatpush1.bf16.msra.mxu0 0
    %871 = vmatprep.subr.bf16.mxu0 0
    %872 = vmatpush1.bf16.msra.mxu0 0
    %873 = vmatprep.subr.bf16.mxu0 0
    %874 = vmatpush1.bf16.msra.mxu0 0
    %875 = vmatprep.subr.bf16.mxu0 0
    %876 = vmatpush1.bf16.msra.mxu0 0
    %877 = vmatprep.subr.bf16.mxu0 0
    %878 = vmatpush1.bf16.msra.mxu0 0
    %879 = vmatprep.subr.bf16.mxu0 0
    %880 = vmatpush1.bf16.msra.mxu0 0
    %881 = vmatprep.subr.bf16.mxu0 0
    %882 = vmatpush1.bf16.msra.mxu0 0
    %883 = vmatprep.subr.bf16.mxu0 0
    %884 = vmatpush1.bf16.msra.mxu0 0
    %885 = vmatprep.subr.bf16.mxu0 0
    %886 = vmatpush1.bf16.msra.mxu0 0
    %887 = vmatprep.mubr.bf16.mxu0 0
    %888 = vmatmul.mubr.bf16.gmra.mrb[0].mxu0 %v853
    %v889 = vpop.f32.mrb[0].mxu0
    %v890 = vadd.f32 %v843, %v889
    %v891 = vpop.f32.mrb[0].mxu0
    %v892 = vpop.f32.mrb[0].mxu0
    %v893 = vpop.f32.mrb[0].mxu0
    %894 = vdwg.mxu0
    %895 = vst [vmem:[#allocation2] sm:$0xff] %v890
    // Predicated region
    $region34: #{forward.5} parent=1 // pred_check
      _
    $region35: #{forward.5} parent=1 // pred_check_branch
      %897 = sbr.rel (0) target = $region37
    $region36: #{forward.5} parent=1 // pred_region
      %s899 = ssub.s32 128, 128
      %900 = vsyncadd [#allocation3], %s899
      %s902 = sshll.u32 [#allocation2], 4
      %s903 = int_to_ptr.vmem [resolvable:$true] %s902
      %905 = dma.vmem_to_hbm [thread:$0]  %s903, 128, %s8, [#allocation3]
    $region37: #{forward.5} parent=1 // pred_fallthru
      _
    // Predicated region
    $region38: #{forward.5} parent=1 // pred_check
      _
    $region39: #{forward.5} parent=1 // pred_check_branch
      %907 = sbr.rel (0) target = $region41
    $region40: #{forward.5} parent=1 // pred_region
      %908 = dma.done [#allocation3], 128
    $region41: #{forward.5} parent=1 // pred_fallthru
      _
    %909 = vsyncpa [#allocation3], 1

</llo_original>
